<compile_context>
chip_gen: v6e
topology: v6e:2x2x1
jax: 0.10.0
libtpu: 0.0.40
codegen_flags: <defaults>
</compile_context>

<pallas_src>
import functools

import jax
import jax.numpy as jnp
import numpy as np
from jax.experimental import pallas as pl
from jax.experimental.pallas import tpu as pltpu

C_TILE = 128                    # lane-dense channel tile for pass 3 / padding unit
_INV_SQRT2 = 0.7071067811865476


def _round_up(a, m):
    return (a + m - 1) // m * m


def _vmem_capacity_bytes():
    """Generation-aware VMEM capacity with a conservative fallback (v7x per-TC)."""
    try:
        info = pltpu.get_tpu_info()
        for name in ("vmem_capacity_bytes", "vmem_bytes", "vmem_size_bytes"):
            cap = getattr(info, name, None)
            if cap:
                return int(cap)
    except Exception:
        pass
    return 64 * 1024 * 1024


# --------------------------------------------------------------------------------------
# Kernel 1 (used twice): per-channel affine -> exact GELU -> full-width matmul(+bias)
#                        -> masked BatchNorm partial statistics
# --------------------------------------------------------------------------------------
def _gelu_conv_bnstats_kernel(x_ref, scale_ref, shift_ref, w_ref, b_ref,
                              y_ref, stats_ref, *, true_l, l_tile):
    # x_ref      : (1, l_tile, C_lhs)   bf16 channels-last input tile
    # scale/shift: (1, C_lhs)           f32 pre-GELU affine (identity for block 1, BN1 for block 2)
    # w_ref      : (C_lhs, F_p)         bf16 flattened conv weights (im2col / pointwise), VMEM-resident
    # b_ref      : (1, F_p)             f32 conv bias
    # y_ref      : (1, l_tile, F_p)     bf16 conv output tile
    # stats_ref  : (1, 1, 8, F_p)       f32: row0 = per-channel sum, row1 = sum of squares
    x = x_ref[0, :, :].astype(jnp.float32)
    t = x * scale_ref[...] + shift_ref[...]
    # exact erf GELU (torch.nn.GELU default) -- computed once per L tile
    t = 0.5 * t * (1.0 + jax.lax.erf(t * jnp.float32(_INV_SQRT2)))

    # single lane-dense MXU contraction over the full output width:
    # bf16 operands, f32 accumulation
    y = jnp.dot(t.astype(jnp.bfloat16), w_ref[...],
                preferred_element_type=jnp.float32)
    y = y + b_ref[...]
    y_ref[0, :, :] = y.astype(y_ref.dtype)

    # partial BatchNorm statistics in f32; mask rows beyond the true sequence length
    li = pl.program_id(1)
    row = jax.lax.broadcasted_iota(jnp.int32, (l_tile, 1), 0) + li * l_tile
    ym = jnp.where(row < true_l, y, 0.0)
    s = jnp.sum(ym, axis=0, keepdims=True)           # (1, F_p)
    ss = jnp.sum(ym * ym, axis=0, keepdims=True)     # (1, F_p)
    r8 = jax.lax.broadcasted_iota(jnp.int32, (8, ym.shape[1]), 0)
    stats_ref[0, 0, :, :] = jnp.where(r8 == 0, s, jnp.where(r8 == 1, ss, 0.0))


# --------------------------------------------------------------------------------------
# Kernel 2: BN2(y2) + BN1(y1) residual, written transposed into lane-dense NCL blocks
# --------------------------------------------------------------------------------------
def _bn_residual_ncl_kernel(y1_ref, y2_ref, s1_ref, h1_ref, s2_ref, h2_ref, out_ref):
    y1 = y1_ref[0, :, :].astype(jnp.float32)
    y2 = y2_ref[0, :, :].astype(jnp.float32)
    z1 = y1 * s1_ref[...] + h1_ref[...]
    z2 = y2 * s2_ref[...] + h2_ref[...]
    out = (z2 + z1).astype(out_ref.dtype)            # (l_tile, C_TILE)
    out_ref[0, :, :] = out.T                         # (C_TILE, l_tile) -> NCL layout


# --------------------------------------------------------------------------------------
# BN finalization (tiny per-channel arrays; stays in plain JAX)
# --------------------------------------------------------------------------------------
def _finalize_bn(stats, count, gamma_p, beta_p, eps):
    s = jnp.sum(stats[:, :, 0, :], axis=(0, 1))
    ss = jnp.sum(stats[:, :, 1, :], axis=(0, 1))
    mean = s / count
    var = jnp.maximum(ss / count - mean * mean, 0.0)   # biased variance (PyTorch BN)
    scale = gamma_p * jax.lax.rsqrt(var + eps)
    shift = beta_p - mean * scale
    return scale.reshape(1, -1), shift.reshape(1, -1)


# --------------------------------------------------------------------------------------
# Wrapper: full ConvTower forward
# --------------------------------------------------------------------------------------
def conv_tower_forward(x, w1, b1, gamma1, beta1, w2, b2, gamma2, beta2, *, eps=1e-5):
    """x: (N, C_in, L) PyTorch NCL.  w1: (F, C_in, 5), w2: (F, F, 1) torch Conv1d
    weight layouts; b*/gamma*/beta*: (F,).  Returns (N, F, L) float32."""
    n, c_in, L = x.shape
    f = w1.shape[0]
    k1 = w1.shape[2]
    assert w2.shape[2] == 1 and w2.shape[0] == w2.shape[1] == f
    pad1 = k1 // 2 + 1 - 1          # ConvTower: dilation = 1 -> "same" length output

    f32, bf16 = jnp.float32, jnp.bfloat16

    # ---------------- tiling / padded sizes (generation-aware VMEM budget) ------------
    c_cat = k1 * c_in
    c_cat_p = _round_up(c_cat, C_TILE)     # conv1 contraction width (im2col)
    f_p = _round_up(f, C_TILE)             # conv1/conv2 output width
    n_ct = f_p // C_TILE
    c_big = max(c_cat_p, f_p)

    cap = _vmem_capacity_bytes()
    vmem_limit = min(cap * 3 // 4, 96 * 1024 * 1024)     # 96 MiB on v5e/v6e, 48 MiB on v7x
    budget = vmem_limit - (4 << 20)                      # headroom
    l_tile_target = 1024 if cap >= 100 * 1024 * 1024 else 512

    def conv_vmem_bytes(lt):
        lhs = 2 * lt * c_big * 2          # double-buffered bf16 LHS tile
        out = 2 * lt * f_p * 2            # double-buffered bf16 output tile
        wgt = 2 * c_big * f_p * 2         # resident bf16 weight (2x margin)
        stats = 2 * 8 * f_p * 4
        scratch = lt * (c_big + f_p) * 4  # in-kernel f32 GELU temp + f32 matmul result
        vecs = 8 * (c_big + f_p) * 4
        return lhs + out + wgt + stats + scratch + vecs

    l_tile = _round_up(min(l_tile_target, _round_up(L, 128)), 128)
    while l_tile > 128 and conv_vmem_bytes(l_tile) > budget:
        l_tile = _round_up(l_tile // 2, 128)
    l_p = _round_up(L, l_tile)
    n_lt = l_p // l_tile

    # ---------------- parameter prep (tiny, one-time) ----------------
    # conv1 im2col weights: w1flat[k*C_in + c, o] = w1[o, c, k]
    w1flat = jnp.transpose(w1, (2, 1, 0)).reshape(c_cat, f).astype(f32)
    w1p = jnp.zeros((c_cat_p, f_p), f32).at[:c_cat, :f].set(w1flat).astype(bf16)
    b1p = jnp.zeros((1, f_p), f32).at[0, :f].set(b1.astype(f32))
    # conv2 (pointwise): w2flat[c, o] = w2[o, c, 0]
    w2flat = jnp.transpose(w2[:, :, 0], (1, 0)).astype(f32)
    w2p = jnp.zeros((f_p, f_p), f32).at[:f, :f].set(w2flat).astype(bf16)
    b2p = jnp.zeros((1, f_p), f32).at[0, :f].set(b2.astype(f32))
    g1p = jnp.zeros((f_p,), f32).at[:f].set(gamma1.astype(f32))
    be1p = jnp.zeros((f_p,), f32).at[:f].set(beta1.astype(f32))
    g2p = jnp.zeros((f_p,), f32).at[:f].set(gamma2.astype(f32))
    be2p = jnp.zeros((f_p,), f32).at[:f].set(beta2.astype(f32))
    id_scale = jnp.ones((1, c_cat_p), f32)
    id_shift = jnp.zeros((1, c_cat_p), f32)

    # ---------------- input prep: NCL -> NLC, "same" pad, im2col over K taps, bf16 ----
    # gelu(0) == 0, so zero padding commutes with the in-kernel GELU.
    x_nlc = jnp.transpose(x, (0, 2, 1)).astype(f32)                     # (N, L, C_in)
    x_padL = jnp.pad(x_nlc, ((0, 0), (pad1, pad1), (0, 0)))
    xcat = jnp.concatenate([x_padL[:, k: k + L, :] for k in range(k1)], axis=-1)
    xcat = jnp.pad(xcat, ((0, 0), (0, l_p - L), (0, c_cat_p - c_cat)))  # (N, l_p, c_cat_p)
    xcat = xcat.astype(bf16)

    # ---------------- conv passes: grid = (N, L_tiles); full output width per step ----
    grid2 = (n, n_lt)
    cparams2 = pltpu.CompilerParams(
        dimension_semantics=("parallel", "parallel"),
        vmem_limit_bytes=vmem_limit)

    def conv_specs(c_lhs):
        in_specs = [
            # LHS tile streams once per (batch, L-tile)
            pl.BlockSpec((1, l_tile, c_lhs), lambda b, li: (b, li, 0)),
            pl.BlockSpec((1, c_lhs), lambda b, li: (0, 0)),
            pl.BlockSpec((1, c_lhs), lambda b, li: (0, 0)),
            # full weight / bias held resident in VMEM (constant block index -> no re-DMA)
            pl.BlockSpec((c_lhs, f_p), lambda b, li: (0, 0)),
            pl.BlockSpec((1, f_p), lambda b, li: (0, 0)),
        ]
        out_specs = [
            pl.BlockSpec((1, l_tile, f_p), lambda b, li: (b, li, 0)),
            pl.BlockSpec((1, 1, 8, f_p), lambda b, li: (b, li, 0, 0)),
        ]
        return in_specs, out_specs

    def conv_cost(c_lhs):
        return pl.CostEstimate(
            flops=int(2 * n * l_p * c_lhs * f_p),
            transcendentals=int(n * l_p * c_lhs),
            bytes_accessed=int(2 * (n * l_p * c_lhs + c_lhs * f_p + n * l_p * f_p)
                               + 4 * n * n_lt * 8 * f_p))

    conv_out_shape = (jax.ShapeDtypeStruct((n, l_p, f_p), bf16),
                      jax.ShapeDtypeStruct((n, n_lt, 8, f_p), f32))
    kern = functools.partial(_gelu_conv_bnstats_kernel, true_l=L, l_tile=l_tile)

    # ---------------- pass 1: GELU -> conv1 -> bias -> BN1 partial stats --------------
    in_specs, out_specs = conv_specs(c_cat_p)
    y1, stats1 = pl.pallas_call(
        kern, grid=grid2, in_specs=in_specs, out_specs=out_specs,
        out_shape=conv_out_shape, compiler_params=cparams2,
        cost_estimate=conv_cost(c_cat_p),
    )(xcat, id_scale, id_shift, w1p, b1p)

    count = float(n * L)
    scale1, shift1 = _finalize_bn(stats1, count, g1p, be1p, eps)

    # ---------------- pass 2: BN1 -> GELU -> conv2 (pointwise) -> BN2 partial stats ---
    in_specs, out_specs = conv_specs(f_p)
    y2, stats2 = pl.pallas_call(
        kern, grid=grid2, in_specs=in_specs, out_specs=out_specs,
        out_shape=conv_out_shape, compiler_params=cparams2,
        cost_estimate=conv_cost(f_p),
    )(y1, scale1, shift1, w2p, b2p)

    scale2, shift2 = _finalize_bn(stats2, count, g2p, be2p, eps)

    # ---------------- pass 3: BN2 + residual(BN1) + in-kernel transpose to NCL --------
    grid3 = (n, n_ct, n_lt)
    cparams3 = pltpu.CompilerParams(
        dimension_semantics=("parallel", "parallel", "parallel"),
        vmem_limit_bytes=vmem_limit)
    vec_spec = pl.BlockSpec((1, C_TILE), lambda b, cj, li: (0, cj))
    act_spec = pl.BlockSpec((1, l_tile, C_TILE), lambda b, cj, li: (b, li, cj))
    out_ncl = pl.pallas_call(
        _bn_residual_ncl_kernel, grid=grid3,
        in_specs=[act_spec, act_spec, vec_spec, vec_spec, vec_spec, vec_spec],
        out_specs=pl.BlockSpec((1, C_TILE, l_tile), lambda b, cj, li: (b, cj, li)),
        out_shape=jax.ShapeDtypeStruct((n, f_p, l_p), f32),
        compiler_params=cparams3,
        cost_estimate=pl.CostEstimate(
            flops=int(6 * n * l_p * f_p), transcendentals=0,
            bytes_accessed=int(8 * n * l_p * f_p)),
    )(y1, y2, scale1, shift1, scale2, shift2)

    # drop channel / length padding (no-op when F and L are already aligned)
    return out_ncl[:, :f, :L]


# --------------------------------------------------------------------------------------
# Pure-JAX f32 reference (for the in-script correctness check)
# --------------------------------------------------------------------------------------
def _conv_block_ref(x, w, b, gamma, beta, kernel_size, dilation, eps=1e-5):
    pad = kernel_size // 2 + dilation - 1
    xg = 0.5 * x * (1.0 + jax.lax.erf(x * _INV_SQRT2))
    y = jax.lax.conv_general_dilated(
        xg, w, window_strides=(1,), padding=[(pad, pad)],
        rhs_dilation=(dilation,), dimension_numbers=("NCH", "OIH", "NCH"),
    ) + b[None, :, None]
    mean = jnp.mean(y, axis=(0, 2), keepdims=True)
    var = jnp.mean((y - mean) ** 2, axis=(0, 2), keepdims=True)      # biased (PyTorch BN)
    return (y - mean) * jax.lax.rsqrt(var + eps) * gamma[None, :, None] + beta[None, :, None]


def conv_tower_reference(x, w1, b1, g1, be1, w2, b2, g2, be2, eps=1e-5):
    z1 = _conv_block_ref(x, w1, b1, g1, be1, 5, 1, eps)
    z2 = _conv_block_ref(z1, w2, b2, g2, be2, 1, 1, eps)
    return z2 + z1


if __name__ == "__main__":
    # Small shapes consistent with ConvTower(in_channels=4, n_filters=8), L=16.
    N, C_in, L = 2, 4, 16
    n_filters = 8

    key = jax.random.PRNGKey(0)
    ks = jax.random.split(key, 9)
    x = jax.random.normal(ks[0], (N, C_in, L), jnp.float32)
    w1 = jax.random.normal(ks[1], (n_filters, C_in, 5), jnp.float32) * 0.2
    b1 = jax.random.normal(ks[2], (n_filters,), jnp.float32) * 0.1
    g1 = 1.0 + 0.1 * jax.random.normal(ks[3], (n_filters,), jnp.float32)
    be1 = 0.1 * jax.random.normal(ks[4], (n_filters,), jnp.float32)
    w2 = jax.random.normal(ks[5], (n_filters, n_filters, 1), jnp.float32) * 0.2
    b2 = jax.random.normal(ks[6], (n_filters,), jnp.float32) * 0.1
    g2 = 1.0 + 0.1 * jax.random.normal(ks[7], (n_filters,), jnp.float32)
    be2 = 0.1 * jax.random.normal(ks[8], (n_filters,), jnp.float32)

    out = jax.jit(conv_tower_forward)(x, w1, b1, g1, be1, w2, b2, g2, be2)
    out = jax.block_until_ready(out)

    ref = conv_tower_reference(x, w1, b1, g1, be1, w2, b2, g2, be2)
    assert out.shape == ref.shape == (N, n_filters, L), (out.shape, ref.shape)
    # Tolerance accounts for bf16 HBM storage of the intermediates and bf16 MXU
    # operands (f32 accumulation / f32 BN statistics) propagated through two
    # BatchNorm layers plus the residual, vs. the all-f32 reference.
    np.testing.assert_allclose(np.asarray(out), np.asarray(ref), atol=5e-2, rtol=5e-2)

    print("KERNEL_OK")
</pallas_src>

<mosaic_0001>
module attributes {stable_mosaic.version = 11 : i64} {
  func.func @_gelu_conv_bnstats_kernel(%arg0: i32, %arg1: i32, %arg2: memref<1x128x128xbf16, #tpu.memory_space<vmem>>, %arg3: memref<1x128xf32, #tpu.memory_space<vmem>>, %arg4: memref<1x128xf32, #tpu.memory_space<vmem>>, %arg5: memref<128x128xbf16, #tpu.memory_space<vmem>>, %arg6: memref<1x128xf32, #tpu.memory_space<vmem>>, %arg7: memref<1x128x128xbf16, #tpu.memory_space<vmem>>, %arg8: memref<1x1x8x128xf32, #tpu.memory_space<vmem>>) attributes {dimension_semantics = [#tpu.dimension_semantics<parallel>, #tpu.dimension_semantics<parallel>], iteration_bounds = array<i64: 2, 1>, scalar_prefetch = 0 : i64, scratch_operands = 0 : i64, tpu.core_type = #tpu.core_type<tc>, window_params = [{transform_indices = @transform_0, window_bounds = array<i64: 1, 128, 128>}, {pipeline_mode = #tpu.pipeline_mode<synchronous>, transform_indices = @transform_1, window_bounds = array<i64: 1, 128>}, {pipeline_mode = #tpu.pipeline_mode<synchronous>, transform_indices = @transform_2, window_bounds = array<i64: 1, 128>}, {pipeline_mode = #tpu.pipeline_mode<synchronous>, transform_indices = @transform_3, window_bounds = array<i64: 128, 128>}, {pipeline_mode = #tpu.pipeline_mode<synchronous>, transform_indices = @transform_4, window_bounds = array<i64: 1, 128>}, {transform_indices = @transform_5, window_bounds = array<i64: 1, 128, 128>}, {transform_indices = @transform_6, window_bounds = array<i64: 1, 1, 8, 128>}]} {
    %c0 = arith.constant 0 : index
    %c0_0 = arith.constant 0 : index
    %c0_1 = arith.constant 0 : index
    %0 = vector.load %arg2[%c0, %c0_0, %c0_1] : memref<1x128x128xbf16, #tpu.memory_space<vmem>>, vector<1x128x128xbf16>
    %1 = vector.shape_cast %0 : vector<1x128x128xbf16> to vector<128x128xbf16>
    %2 = arith.extf %1 : vector<128x128xbf16> to vector<128x128xf32>
    %c0_2 = arith.constant 0 : index
    %c0_3 = arith.constant 0 : index
    %3 = vector.load %arg3[%c0_2, %c0_3] : memref<1x128xf32, #tpu.memory_space<vmem>>, vector<1x128xf32>
    %4 = vector.broadcast %3 : vector<1x128xf32> to vector<128x128xf32>
    %5 = arith.mulf %2, %4 : vector<128x128xf32>
    %c0_4 = arith.constant 0 : index
    %c0_5 = arith.constant 0 : index
    %6 = vector.load %arg4[%c0_4, %c0_5] : memref<1x128xf32, #tpu.memory_space<vmem>>, vector<1x128xf32>
    %7 = vector.broadcast %6 : vector<1x128xf32> to vector<128x128xf32>
    %8 = arith.addf %5, %7 : vector<128x128xf32>
    %cst = arith.constant 5.000000e-01 : f32
    %9 = vector.broadcast %cst : f32 to vector<128x128xf32>
    %10 = arith.mulf %9, %8 : vector<128x128xf32>
    %cst_6 = arith.constant 0.707106769 : f32
    %11 = vector.broadcast %cst_6 : f32 to vector<128x128xf32>
    %12 = arith.mulf %8, %11 : vector<128x128xf32>
    %13 = math.erf %12 : vector<128x128xf32>
    %cst_7 = arith.constant 1.000000e+00 : f32
    %14 = vector.broadcast %cst_7 : f32 to vector<128x128xf32>
    %15 = arith.addf %14, %13 : vector<128x128xf32>
    %16 = arith.mulf %10, %15 : vector<128x128xf32>
    %17 = arith.truncf %16 : vector<128x128xf32> to vector<128x128xbf16>
    %c0_8 = arith.constant 0 : index
    %c0_9 = arith.constant 0 : index
    %18 = vector.load %arg5[%c0_8, %c0_9] : memref<128x128xbf16, #tpu.memory_space<vmem>>, vector<128x128xbf16>
    %cst_10 = arith.constant dense<0.000000e+00> : vector<128x128xf32>
    %19 = tpu.matmul %17, %18, %cst_10 {dimension_numbers = #tpu.dot_dimension_numbers<[1], [0], [0], [1], [0, 0, 1, 1], [], []>} : vector<128x128xbf16>, vector<128x128xbf16>, vector<128x128xf32> -> vector<128x128xf32>
    %c0_11 = arith.constant 0 : index
    %c0_12 = arith.constant 0 : index
    %20 = vector.load %arg6[%c0_11, %c0_12] : memref<1x128xf32, #tpu.memory_space<vmem>>, vector<1x128xf32>
    %21 = vector.broadcast %20 : vector<1x128xf32> to vector<128x128xf32>
    %22 = arith.addf %19, %21 : vector<128x128xf32>
    %23 = arith.truncf %22 : vector<128x128xf32> to vector<128x128xbf16>
    %c0_13 = arith.constant 0 : index
    %c0_14 = arith.constant 0 : index
    %c0_15 = arith.constant 0 : index
    %24 = vector.load %arg7[%c0_13, %c0_14, %c0_15] : memref<1x128x128xbf16, #tpu.memory_space<vmem>>, vector<1x128x128xbf16>
    %25 = vector.shape_cast %24 : vector<1x128x128xbf16> to vector<128x128xbf16>
    %26 = vector.shape_cast %23 : vector<128x128xbf16> to vector<1x128x128xbf16>
    tpu.vector_store %arg7[%c0_13, %c0_14, %c0_15], %26 {strides = array<i32>} : memref<1x128x128xbf16, #tpu.memory_space<vmem>>, vector<1x128x128xbf16>,
    %27 = tpu.iota {dimensions = array<i32: 0>} : vector<128x1xi32>
    %c128_i32 = arith.constant 128 : i32
    %28 = arith.muli %arg1, %c128_i32 : i32
    %29 = vector.broadcast %28 : i32 to vector<128x1xi32>
    %30 = arith.addi %27, %29 : vector<128x1xi32>
    %c16_i32 = arith.constant 16 : i32
    %31 = vector.broadcast %c16_i32 : i32 to vector<128x1xi32>
    %32 = arith.cmpi slt, %30, %31 : vector<128x1xi32>
    %cst_16 = arith.constant 0.000000e+00 : f32
    %33 = vector.shape_cast %32 : vector<128x1xi1> to vector<128x1xi1>
    %34 = vector.broadcast %33 : vector<128x1xi1> to vector<128x128xi1>
    %35 = vector.broadcast %cst_16 : f32 to vector<128x128xf32>
    %36 = arith.select %34, %22, %35 : vector<128x128xi1>, vector<128x128xf32>
    %cst_17 = arith.constant dense<0.000000e+00> : vector<128xf32>
    %37 = vector.multi_reduction <add>, %36, %cst_17 [0] : vector<128x128xf32> to vector<128xf32>
    %38 = vector.shape_cast %37 : vector<128xf32> to vector<1x128xf32>
    %39 = arith.mulf %36, %36 : vector<128x128xf32>
    %cst_18 = arith.constant dense<0.000000e+00> : vector<128xf32>
    %40 = vector.multi_reduction <add>, %39, %cst_18 [0] : vector<128x128xf32> to vector<128xf32>
    %41 = vector.shape_cast %40 : vector<128xf32> to vector<1x128xf32>
    %42 = tpu.iota {dimensions = array<i32: 0>} : vector<8x128xi32>
    %c0_i32 = arith.constant 0 : i32
    %43 = vector.broadcast %c0_i32 : i32 to vector<8x128xi32>
    %44 = arith.cmpi eq, %42, %43 : vector<8x128xi32>
    %c1_i32 = arith.constant 1 : i32
    %45 = vector.broadcast %c1_i32 : i32 to vector<8x128xi32>
    %46 = arith.cmpi eq, %42, %45 : vector<8x128xi32>
    %cst_19 = arith.constant 0.000000e+00 : f32
    %47 = vector.shape_cast %41 : vector<1x128xf32> to vector<1x128xf32>
    %48 = vector.broadcast %47 : vector<1x128xf32> to vector<8x128xf32>
    %49 = vector.broadcast %cst_19 : f32 to vector<8x128xf32>
    %50 = arith.select %46, %48, %49 : vector<8x128xi1>, vector<8x128xf32>
    %51 = vector.shape_cast %38 : vector<1x128xf32> to vector<1x128xf32>
    %52 = vector.broadcast %51 : vector<1x128xf32> to vector<8x128xf32>
    %53 = arith.select %44, %52, %50 : vector<8x128xi1>, vector<8x128xf32>
    %c0_20 = arith.constant 0 : index
    %c0_21 = arith.constant 0 : index
    %c0_22 = arith.constant 0 : index
    %c0_23 = arith.constant 0 : index
    %54 = vector.load %arg8[%c0_20, %c0_21, %c0_22, %c0_23] : memref<1x1x8x128xf32, #tpu.memory_space<vmem>>, vector<1x1x8x128xf32>
    %55 = vector.shape_cast %54 : vector<1x1x8x128xf32> to vector<8x128xf32>
    %56 = vector.shape_cast %53 : vector<8x128xf32> to vector<1x1x8x128xf32>
    tpu.vector_store %arg8[%c0_20, %c0_21, %c0_22, %c0_23], %56 {strides = array<i32>} : memref<1x1x8x128xf32, #tpu.memory_space<vmem>>, vector<1x1x8x128xf32>,
    return
  }
  func.func @transform_0(%arg0: i32, %arg1: i32) -> (i32, i32, i32) {
    %c0_i32 = arith.constant 0 : i32
    %c0_i32_0 = arith.constant 0 : i32
    return %arg0, %arg1, %c0_i32 : i32, i32, i32
  }
  func.func @transform_1(%arg0: i32, %arg1: i32) -> (i32, i32) {
    %c0_i32 = arith.constant 0 : i32
    %c0_i32_0 = arith.constant 0 : i32
    %c0_i32_1 = arith.constant 0 : i32
    return %c0_i32, %c0_i32_0 : i32, i32
  }
  func.func @transform_2(%arg0: i32, %arg1: i32) -> (i32, i32) {
    %c0_i32 = arith.constant 0 : i32
    %c0_i32_0 = arith.constant 0 : i32
    %c0_i32_1 = arith.constant 0 : i32
    return %c0_i32, %c0_i32_0 : i32, i32
  }
  func.func @transform_3(%arg0: i32, %arg1: i32) -> (i32, i32) {
    %c0_i32 = arith.constant 0 : i32
    %c0_i32_0 = arith.constant 0 : i32
    %c0_i32_1 = arith.constant 0 : i32
    return %c0_i32, %c0_i32_0 : i32, i32
  }
  func.func @transform_4(%arg0: i32, %arg1: i32) -> (i32, i32) {
    %c0_i32 = arith.constant 0 : i32
    %c0_i32_0 = arith.constant 0 : i32
    %c0_i32_1 = arith.constant 0 : i32
    return %c0_i32, %c0_i32_0 : i32, i32
  }
  func.func @transform_5(%arg0: i32, %arg1: i32) -> (i32, i32, i32) {
    %c0_i32 = arith.constant 0 : i32
    %c0_i32_0 = arith.constant 0 : i32
    return %arg0, %arg1, %c0_i32 : i32, i32, i32
  }
  func.func @transform_6(%arg0: i32, %arg1: i32) -> (i32, i32, i32, i32) {
    %c0_i32 = arith.constant 0 : i32
    %c0_i32_0 = arith.constant 0 : i32
    %c0_i32_1 = arith.constant 0 : i32
    return %arg0, %arg1, %c0_i32, %c0_i32_0 : i32, i32, i32, i32
  }
}

module attributes {stable_mosaic.version = 11 : i64} {
  func.func @_bn_residual_ncl_kernel(%arg0: i32, %arg1: i32, %arg2: i32, %arg3: memref<1x128x128xbf16, #tpu.memory_space<vmem>>, %arg4: memref<1x128x128xbf16, #tpu.memory_space<vmem>>, %arg5: memref<1x128xf32, #tpu.memory_space<vmem>>, %arg6: memref<1x128xf32, #tpu.memory_space<vmem>>, %arg7: memref<1x128xf32, #tpu.memory_space<vmem>>, %arg8: memref<1x128xf32, #tpu.memory_space<vmem>>, %arg9: memref<1x128x128xf32, #tpu.memory_space<vmem>>) attributes {dimension_semantics = [#tpu.dimension_semantics<parallel>, #tpu.dimension_semantics<parallel>, #tpu.dimension_semantics<parallel>], iteration_bounds = array<i64: 2, 1, 1>, scalar_prefetch = 0 : i64, scratch_operands = 0 : i64, tpu.core_type = #tpu.core_type<tc>, window_params = [{transform_indices = @transform_0, window_bounds = array<i64: 1, 128, 128>}, {transform_indices = @transform_1, window_bounds = array<i64: 1, 128, 128>}, {transform_indices = @transform_2, window_bounds = array<i64: 1, 128>}, {transform_indices = @transform_3, window_bounds = array<i64: 1, 128>}, {transform_indices = @transform_4, window_bounds = array<i64: 1, 128>}, {transform_indices = @transform_5, window_bounds = array<i64: 1, 128>}, {transform_indices = @transform_6, window_bounds = array<i64: 1, 128, 128>}]} {
    %c0 = arith.constant 0 : index
    %c0_0 = arith.constant 0 : index
    %c0_1 = arith.constant 0 : index
    %0 = vector.load %arg3[%c0, %c0_0, %c0_1] : memref<1x128x128xbf16, #tpu.memory_space<vmem>>, vector<1x128x128xbf16>
    %1 = vector.shape_cast %0 : vector<1x128x128xbf16> to vector<128x128xbf16>
    %2 = arith.extf %1 : vector<128x128xbf16> to vector<128x128xf32>
    %c0_2 = arith.constant 0 : index
    %c0_3 = arith.constant 0 : index
    %c0_4 = arith.constant 0 : index
    %3 = vector.load %arg4[%c0_2, %c0_3, %c0_4] : memref<1x128x128xbf16, #tpu.memory_space<vmem>>, vector<1x128x128xbf16>
    %4 = vector.shape_cast %3 : vector<1x128x128xbf16> to vector<128x128xbf16>
    %5 = arith.extf %4 : vector<128x128xbf16> to vector<128x128xf32>
    %c0_5 = arith.constant 0 : index
    %c0_6 = arith.constant 0 : index
    %6 = vector.load %arg5[%c0_5, %c0_6] : memref<1x128xf32, #tpu.memory_space<vmem>>, vector<1x128xf32>
    %7 = vector.broadcast %6 : vector<1x128xf32> to vector<128x128xf32>
    %8 = arith.mulf %2, %7 : vector<128x128xf32>
    %c0_7 = arith.constant 0 : index
    %c0_8 = arith.constant 0 : index
    %9 = vector.load %arg6[%c0_7, %c0_8] : memref<1x128xf32, #tpu.memory_space<vmem>>, vector<1x128xf32>
    %10 = vector.broadcast %9 : vector<1x128xf32> to vector<128x128xf32>
    %11 = arith.addf %8, %10 : vector<128x128xf32>
    %c0_9 = arith.constant 0 : index
    %c0_10 = arith.constant 0 : index
    %12 = vector.load %arg7[%c0_9, %c0_10] : memref<1x128xf32, #tpu.memory_space<vmem>>, vector<1x128xf32>
    %13 = vector.broadcast %12 : vector<1x128xf32> to vector<128x128xf32>
    %14 = arith.mulf %5, %13 : vector<128x128xf32>
    %c0_11 = arith.constant 0 : index
    %c0_12 = arith.constant 0 : index
    %15 = vector.load %arg8[%c0_11, %c0_12] : memref<1x128xf32, #tpu.memory_space<vmem>>, vector<1x128xf32>
    %16 = vector.broadcast %15 : vector<1x128xf32> to vector<128x128xf32>
    %17 = arith.addf %14, %16 : vector<128x128xf32>
    %18 = arith.addf %17, %11 : vector<128x128xf32>
    %19 = tpu.transpose %18, [1, 0] : vector<128x128xf32> -> vector<128x128xf32>
    %c0_13 = arith.constant 0 : index
    %c0_14 = arith.constant 0 : index
    %c0_15 = arith.constant 0 : index
    %20 = vector.load %arg9[%c0_13, %c0_14, %c0_15] : memref<1x128x128xf32, #tpu.memory_space<vmem>>, vector<1x128x128xf32>
    %21 = vector.shape_cast %20 : vector<1x128x128xf32> to vector<128x128xf32>
    %22 = vector.shape_cast %19 : vector<128x128xf32> to vector<1x128x128xf32>
    tpu.vector_store %arg9[%c0_13, %c0_14, %c0_15], %22 {strides = array<i32>} : memref<1x128x128xf32, #tpu.memory_space<vmem>>, vector<1x128x128xf32>,
    return
  }
  func.func @transform_0(%arg0: i32, %arg1: i32, %arg2: i32) -> (i32, i32, i32) {
    %c0_i32 = arith.constant 0 : i32
    return %arg0, %arg2, %arg1 : i32, i32, i32
  }
  func.func @transform_1(%arg0: i32, %arg1: i32, %arg2: i32) -> (i32, i32, i32) {
    %c0_i32 = arith.constant 0 : i32
    return %arg0, %arg2, %arg1 : i32, i32, i32
  }
  func.func @transform_2(%arg0: i32, %arg1: i32, %arg2: i32) -> (i32, i32) {
    %c0_i32 = arith.constant 0 : i32
    %c0_i32_0 = arith.constant 0 : i32
    return %c0_i32, %arg1 : i32, i32
  }
  func.func @transform_3(%arg0: i32, %arg1: i32, %arg2: i32) -> (i32, i32) {
    %c0_i32 = arith.constant 0 : i32
    %c0_i32_0 = arith.constant 0 : i32
    return %c0_i32, %arg1 : i32, i32
  }
  func.func @transform_4(%arg0: i32, %arg1: i32, %arg2: i32) -> (i32, i32) {
    %c0_i32 = arith.constant 0 : i32
    %c0_i32_0 = arith.constant 0 : i32
    return %c0_i32, %arg1 : i32, i32
  }
  func.func @transform_5(%arg0: i32, %arg1: i32, %arg2: i32) -> (i32, i32) {
    %c0_i32 = arith.constant 0 : i32
    %c0_i32_0 = arith.constant 0 : i32
    return %c0_i32, %arg1 : i32, i32
  }
  func.func @transform_6(%arg0: i32, %arg1: i32, %arg2: i32) -> (i32, i32, i32) {
    %c0_i32 = arith.constant 0 : i32
    return %arg0, %arg1, %arg2 : i32, i32, i32
  }
}

</mosaic_0001>

<llo_original>
// kernel: conv_tower_forward.5
$region0: #{conv_tower_forward.5}
  #allocation0 [shape = 'u32[]', space=smem, size = 0x4, offset = 0x4, fixed_abs, tag = 'smem constant byte address 0x4 - core index']
  #allocation1 [shape = 'u32[144,128]{1,0:T(1,128)}', space=vmem, size = 0x12000, scoped, tag = 'internal scratch']
  %s0 = inlined_call_operand.vmem [shape: bf16[2,128,128], index: 0, kind: input, shape index: {}]
  %s1 = inlined_call_operand.vmem [shape: bf16[2,128,128], index: 1, kind: input, shape index: {}]
  %s2 = inlined_call_operand.vmem [shape: f32[1,128], index: 2, kind: input, shape index: {}]
  %s3 = inlined_call_operand.vmem [shape: f32[1,128], index: 3, kind: input, shape index: {}]
  %s4 = inlined_call_operand.vmem [shape: f32[1,128], index: 4, kind: input, shape index: {}]
  %s5 = inlined_call_operand.vmem [shape: f32[1,128], index: 5, kind: input, shape index: {}]
  %s6 = inlined_call_operand.vmem [shape: f32[2,128,128], index: 6, kind: output, shape index: {}]
  %s7 = sld [smem:[#allocation0]]
  $region57: #{conv_tower_forward.5} parent=0
    _
  %s9 = ssub.s32 1, %s7
  %s10 = scalar_select 0, %s9, %s7
  loop: start=0, step=1, limit=4
  $region2: #{conv_tower_forward.5} parent=0 // loop_pre_header
    _
  $region3: #{conv_tower_forward.5} parent=0 // loop_header
    %s12 = sphi 0, %s16
    %p13 = scmp.ge.s32.totalorder %s12, 4
    %s19 = sphi 0, %s38
    %s20 = sphi 0, %s34
    %s21 = sphi 0, %s30
    %s22 = sphi 0, %s19
    %s23 = sphi 0, %s20
    %s24 = sphi 0, %s21
    %s25 = sphi 0, %s22
    %s26 = sphi 0, %s23
    %s27 = sphi 0, %s24
    %s45 = sphi 0, %s47
    %s48 = sphi 0, %s45
    %s49 = sphi 0, %s48
    %s65 = sphi 0, %s49
    %s75 = sphi 0, %s77
    %s78 = sphi 0, %s75
    %s79 = sphi 0, %s78
    %s95 = sphi 0, %s79
    %s101 = sphi 0, %s103
    %s104 = sphi 0, %s101
    %s105 = sphi 0, %s104
    %s121 = sphi 0, %s105
    %s127 = sphi 0, %s129
    %s130 = sphi 0, %s127
    %s131 = sphi 0, %s130
    %s147 = sphi 0, %s131
    %s153 = sphi 0, %s155
    %s156 = sphi 0, %s153
    %s157 = sphi 0, %s156
    %s173 = sphi 0, %s157
    %s179 = sphi 0, %s181
    %s182 = sphi 0, %s179
    %s183 = sphi 0, %s182
    %s199 = sphi 0, %s183
    %s209 = sphi 0, %s211
    %s212 = sphi 0, %s209
    %s213 = sphi 0, %s212
    %s229 = sphi 0, %s213
  $region4: #{conv_tower_forward.5} parent=0 // loop_header_branch
    %15 = sbr.rel (%p13) target = $region8
  $region5: #{conv_tower_forward.5} parent=0 // loop_body
    %s17 = ssub.s32 %s12, 1
    %s18 = ssub.s32 %s12, 2
    %s28 = sadd.s32 1, %s21
    %p29 = scmp.ge.s32.totalorder %s28, 1
    %s30 = scalar_select %p29, 0, %s28
    %s31 = sadd.s32 1, %s20
    %s32 = scalar_select %p29, %s31, %s20
    %p33 = scmp.ge.s32.totalorder %s32, 1
    %s34 = scalar_select %p33, 0, %s32
    %s35 = sadd.s32 1, %s19
    %s36 = scalar_select %p33, %s35, %s19
    %p37 = scmp.ge.s32.totalorder %s36, 2
    %s38 = scalar_select %p37, 0, %s36
    %s39 = ssub.s32 %s19, %s38
    %s40 = ssub.s32 %s21, %s30
    %s41 = sor.u32 %s39, %s40
    %s42 = ssub.s32 %s20, %s34
    %s43 = sor.u32 %s41, %s42
    %p44 = scmp.eq.s32.totalorder %s43, 0
    %s46 = sadd.s32 %s45, 1
    %s47 = scalar_select %p44, %s45, %s46
    %p50 = pneg %p44
    %p51 = scmp.eq.s32.totalorder %s12, 1
    %p52 = por %p50, %p51
    %p53 = scmp.ne.s32.totalorder %s45, %s48
    %p54 = scmp.eq.s32.totalorder %s12, 0
    %p55 = por %p53, %p54
    %p56 = scmp.ne.s32.totalorder %s45, %s48
    %p57 = scmp.eq.s32.totalorder %s17, 1
    %p58 = por %p56, %p57
    %p59 = scmp.ne.s32.totalorder %s48, %s49
    %p60 = scmp.eq.s32.totalorder %s17, 0
    %p61 = por %p59, %p60
    %p62 = scmp.ne.s32.totalorder %s48, %s49
    %p63 = scmp.eq.s32.totalorder %s18, 1
    %p64 = por %p62, %p63
    %p66 = scmp.ne.s32.totalorder %s49, %s65
    %p67 = scmp.eq.s32.totalorder %s18, 0
    %p68 = por %p66, %p67
    %s69 = ssub.s32 %s19, %s38
    %s70 = ssub.s32 %s21, %s30
    %s71 = sor.u32 %s69, %s70
    %s72 = ssub.s32 %s20, %s34
    %s73 = sor.u32 %s71, %s72
    %p74 = scmp.eq.s32.totalorder %s73, 0
    %s76 = sadd.s32 %s75, 1
    %s77 = scalar_select %p74, %s75, %s76
    %p80 = pneg %p74
    %p81 = scmp.eq.s32.totalorder %s12, 1
    %p82 = por %p80, %p81
    %p83 = scmp.ne.s32.totalorder %s75, %s78
    %p84 = scmp.eq.s32.totalorder %s12, 0
    %p85 = por %p83, %p84
    %p86 = scmp.ne.s32.totalorder %s75, %s78
    %p87 = scmp.eq.s32.totalorder %s17, 1
    %p88 = por %p86, %p87
    %p89 = scmp.ne.s32.totalorder %s78, %s79
    %p90 = scmp.eq.s32.totalorder %s17, 0
    %p91 = por %p89, %p90
    %p92 = scmp.ne.s32.totalorder %s78, %s79
    %p93 = scmp.eq.s32.totalorder %s18, 1
    %p94 = por %p92, %p93
    %p96 = scmp.ne.s32.totalorder %s79, %s95
    %p97 = scmp.eq.s32.totalorder %s18, 0
    %p98 = por %p96, %p97
    %s99 = ssub.s32 %s20, %s34
    %p100 = scmp.eq.s32.totalorder %s99, 0
    %s102 = sadd.s32 %s101, 1
    %s103 = scalar_select %p100, %s101, %s102
    %p106 = pneg %p100
    %p107 = scmp.eq.s32.totalorder %s12, 1
    %p108 = por %p106, %p107
    %p109 = scmp.ne.s32.totalorder %s101, %s104
    %p110 = scmp.eq.s32.totalorder %s12, 0
    %p111 = por %p109, %p110
    %p112 = scmp.ne.s32.totalorder %s101, %s104
    %p113 = scmp.eq.s32.totalorder %s17, 1
    %p114 = por %p112, %p113
    %p115 = scmp.ne.s32.totalorder %s104, %s105
    %p116 = scmp.eq.s32.totalorder %s17, 0
    %p117 = por %p115, %p116
    %p118 = scmp.ne.s32.totalorder %s104, %s105
    %p119 = scmp.eq.s32.totalorder %s18, 1
    %p120 = por %p118, %p119
    %p122 = scmp.ne.s32.totalorder %s105, %s121
    %p123 = scmp.eq.s32.totalorder %s18, 0
    %p124 = por %p122, %p123
    %s125 = ssub.s32 %s20, %s34
    %p126 = scmp.eq.s32.totalorder %s125, 0
    %s128 = sadd.s32 %s127, 1
    %s129 = scalar_select %p126, %s127, %s128
    %p132 = pneg %p126
    %p133 = scmp.eq.s32.totalorder %s12, 1
    %p134 = por %p132, %p133
    %p135 = scmp.ne.s32.totalorder %s127, %s130
    %p136 = scmp.eq.s32.totalorder %s12, 0
    %p137 = por %p135, %p136
    %p138 = scmp.ne.s32.totalorder %s127, %s130
    %p139 = scmp.eq.s32.totalorder %s17, 1
    %p140 = por %p138, %p139
    %p141 = scmp.ne.s32.totalorder %s130, %s131
    %p142 = scmp.eq.s32.totalorder %s17, 0
    %p143 = por %p141, %p142
    %p144 = scmp.ne.s32.totalorder %s130, %s131
    %p145 = scmp.eq.s32.totalorder %s18, 1
    %p146 = por %p144, %p145
    %p148 = scmp.ne.s32.totalorder %s131, %s147
    %p149 = scmp.eq.s32.totalorder %s18, 0
    %p150 = por %p148, %p149
    %s151 = ssub.s32 %s20, %s34
    %p152 = scmp.eq.s32.totalorder %s151, 0
    %s154 = sadd.s32 %s153, 1
    %s155 = scalar_select %p152, %s153, %s154
    %p158 = pneg %p152
    %p159 = scmp.eq.s32.totalorder %s12, 1
    %p160 = por %p158, %p159
    %p161 = scmp.ne.s32.totalorder %s153, %s156
    %p162 = scmp.eq.s32.totalorder %s12, 0
    %p163 = por %p161, %p162
    %p164 = scmp.ne.s32.totalorder %s153, %s156
    %p165 = scmp.eq.s32.totalorder %s17, 1
    %p166 = por %p164, %p165
    %p167 = scmp.ne.s32.totalorder %s156, %s157
    %p168 = scmp.eq.s32.totalorder %s17, 0
    %p169 = por %p167, %p168
    %p170 = scmp.ne.s32.totalorder %s156, %s157
    %p171 = scmp.eq.s32.totalorder %s18, 1
    %p172 = por %p170, %p171
    %p174 = scmp.ne.s32.totalorder %s157, %s173
    %p175 = scmp.eq.s32.totalorder %s18, 0
    %p176 = por %p174, %p175
    %s177 = ssub.s32 %s20, %s34
    %p178 = scmp.eq.s32.totalorder %s177, 0
    %s180 = sadd.s32 %s179, 1
    %s181 = scalar_select %p178, %s179, %s180
    %p184 = pneg %p178
    %p185 = scmp.eq.s32.totalorder %s12, 1
    %p186 = por %p184, %p185
    %p187 = scmp.ne.s32.totalorder %s179, %s182
    %p188 = scmp.eq.s32.totalorder %s12, 0
    %p189 = por %p187, %p188
    %p190 = scmp.ne.s32.totalorder %s179, %s182
    %p191 = scmp.eq.s32.totalorder %s17, 1
    %p192 = por %p190, %p191
    %p193 = scmp.ne.s32.totalorder %s182, %s183
    %p194 = scmp.eq.s32.totalorder %s17, 0
    %p195 = por %p193, %p194
    %p196 = scmp.ne.s32.totalorder %s182, %s183
    %p197 = scmp.eq.s32.totalorder %s18, 1
    %p198 = por %p196, %p197
    %p200 = scmp.ne.s32.totalorder %s183, %s199
    %p201 = scmp.eq.s32.totalorder %s18, 0
    %p202 = por %p200, %p201
    %s203 = ssub.s32 %s19, %s38
    %s204 = ssub.s32 %s20, %s34
    %s205 = sor.u32 %s203, %s204
    %s206 = ssub.s32 %s21, %s30
    %s207 = sor.u32 %s205, %s206
    %p208 = scmp.eq.s32.totalorder %s207, 0
    %s210 = sadd.s32 %s209, 1
    %s211 = scalar_select %p208, %s209, %s210
    %p214 = pneg %p208
    %p215 = scmp.eq.s32.totalorder %s12, 1
    %p216 = por %p214, %p215
    %p217 = scmp.ne.s32.totalorder %s209, %s212
    %p218 = scmp.eq.s32.totalorder %s12, 0
    %p219 = por %p217, %p218
    %p220 = scmp.ne.s32.totalorder %s209, %s212
    %p221 = scmp.eq.s32.totalorder %s17, 1
    %p222 = por %p220, %p221
    %p223 = scmp.ne.s32.totalorder %s212, %s213
    %p224 = scmp.eq.s32.totalorder %s17, 0
    %p225 = por %p223, %p224
    %p226 = scmp.ne.s32.totalorder %s212, %s213
    %p227 = scmp.eq.s32.totalorder %s18, 1
    %p228 = por %p226, %p227
    %p230 = scmp.ne.s32.totalorder %s213, %s229
    %p231 = scmp.eq.s32.totalorder %s18, 0
    %p232 = por %p230, %p231
    %p233 = scmp.le.s32.totalorder 1, %s12
    %p234 = scmp.lt.s32.totalorder %s12, 3
    %p235 = pnand %p233, %p234
    %p236 = pneg %p235
    // Predicated region
    $region9: #{conv_tower_forward.5} parent=5 // pred_check
      _
    $region10: #{conv_tower_forward.5} parent=5 // pred_check_branch
      %238 = sbr.rel (%p235) target = $region12
    $region11: #{conv_tower_forward.5} parent=5 // pred_region
      %s239 = ssub.s32 %s12, 1
      // Predicated region
      $region13: #{conv_tower_forward.5} parent=11 // pred_check
        %p240 = pneg %p117
      $region14: #{conv_tower_forward.5} parent=11 // pred_check_branch
        %242 = sbr.rel (%p240) target = $region16
      $region15: #{conv_tower_forward.5} parent=11 // pred_region
        %p243 = scmp.lt.s32.totalorder %s23, 0
        %s244 = scalar_select %p243, %s23, 0
        %s245 = scalar_lea.vmem %s2, %s244
      $region16: #{conv_tower_forward.5} parent=11 // pred_fallthru
        _
      // Predicated region
      $region17: #{conv_tower_forward.5} parent=11 // pred_check
        %p246 = pneg %p143
      $region18: #{conv_tower_forward.5} parent=11 // pred_check_branch
        %248 = sbr.rel (%p246) target = $region20
      $region19: #{conv_tower_forward.5} parent=11 // pred_region
        %p249 = scmp.lt.s32.totalorder %s23, 0
        %s250 = scalar_select %p249, %s23, 0
        %s251 = scalar_lea.vmem %s3, %s250
      $region20: #{conv_tower_forward.5} parent=11 // pred_fallthru
        _
      // Predicated region
      $region21: #{conv_tower_forward.5} parent=11 // pred_check
        %p252 = pneg %p169
      $region22: #{conv_tower_forward.5} parent=11 // pred_check_branch
        %254 = sbr.rel (%p252) target = $region24
      $region23: #{conv_tower_forward.5} parent=11 // pred_region
        %p255 = scmp.lt.s32.totalorder %s23, 0
        %s256 = scalar_select %p255, %s23, 0
        %s257 = scalar_lea.vmem %s4, %s256
      $region24: #{conv_tower_forward.5} parent=11 // pred_fallthru
        _
      // Predicated region
      $region25: #{conv_tower_forward.5} parent=11 // pred_check
        %p258 = pneg %p195
      $region26: #{conv_tower_forward.5} parent=11 // pred_check_branch
        %260 = sbr.rel (%p258) target = $region28
      $region27: #{conv_tower_forward.5} parent=11 // pred_region
        %p261 = scmp.lt.s32.totalorder %s23, 0
        %s262 = scalar_select %p261, %s23, 0
        %s263 = scalar_lea.vmem %s5, %s262
      $region28: #{conv_tower_forward.5} parent=11 // pred_fallthru
        _
    $region12: #{conv_tower_forward.5} parent=5 // pred_fallthru
      _
    %p264 = scmp.lt.s32.totalorder %s12, 2
    // Predicated region
    $region29: #{conv_tower_forward.5} parent=5 // pred_check
      %p265 = pneg %p264
    $region30: #{conv_tower_forward.5} parent=5 // pred_check_branch
      %267 = sbr.rel (%p265) target = $region32
    $region31: #{conv_tower_forward.5} parent=5 // pred_region
      // Predicated region
      $region33: #{conv_tower_forward.5} parent=31 // pred_check
        %p268 = pneg %p55
      $region34: #{conv_tower_forward.5} parent=31 // pred_check_branch
        %270 = sbr.rel (%p268) target = $region36
      $region35: #{conv_tower_forward.5} parent=31 // pred_region
        %s271 = smul.u32 16, %s21
        %p272 = scmp.lt.s32.totalorder %s19, 1
        %s273 = scalar_select %p272, %s19, 1
        %p274 = scmp.lt.s32.totalorder %s271, 15
        %s275 = scalar_select %p274, %s271, 15
        %p276 = scmp.lt.s32.totalorder %s20, 0
        %s277 = scalar_select %p276, %s20, 0
        %s278 = sadd.s32 %s277, %s275
        %s279 = smul.addr %s273, 16
        %s280 = sadd.s32 %s278, %s279
        %s281 = smul.addr %s280, 4
        %s282 = scalar_lea.vmem %s0, %s281
        %s283 = smul.u32 16, %s21
      $region36: #{conv_tower_forward.5} parent=31 // pred_fallthru
        _
      // Predicated region
      $region37: #{conv_tower_forward.5} parent=31 // pred_check
        %p284 = pneg %p85
      $region38: #{conv_tower_forward.5} parent=31 // pred_check_branch
        %286 = sbr.rel (%p284) target = $region40
      $region39: #{conv_tower_forward.5} parent=31 // pred_region
        %s287 = smul.u32 16, %s21
        %p288 = scmp.lt.s32.totalorder %s19, 1
        %s289 = scalar_select %p288, %s19, 1
        %p290 = scmp.lt.s32.totalorder %s287, 15
        %s291 = scalar_select %p290, %s287, 15
        %p292 = scmp.lt.s32.totalorder %s20, 0
        %s293 = scalar_select %p292, %s20, 0
        %s294 = sadd.s32 %s293, %s291
        %s295 = smul.addr %s289, 16
        %s296 = sadd.s32 %s294, %s295
        %s297 = smul.addr %s296, 4
        %s298 = scalar_lea.vmem %s1, %s297
        %s299 = smul.u32 16, %s21
      $region40: #{conv_tower_forward.5} parent=31 // pred_fallthru
        _
    $region32: #{conv_tower_forward.5} parent=5 // pred_fallthru
      _
    %p300 = scmp.le.s32.totalorder 1, %s12
    %p301 = scmp.lt.s32.totalorder %s12, 3
    %p302 = pnand %p300, %p301
    %p303 = pneg %p302
    // Predicated region
    $region41: #{conv_tower_forward.5} parent=5 // pred_check
      _
    $region42: #{conv_tower_forward.5} parent=5 // pred_check_branch
      %305 = sbr.rel (%p302) target = $region44
    $region43: #{conv_tower_forward.5} parent=5 // pred_region
      %s306 = ssub.s32 %s12, 1
      %s307 = smul.u32 16, %s24
      %p308 = scmp.lt.s32.totalorder %s22, 1
      %s309 = scalar_select %p308, %s22, 1
      %p310 = scmp.lt.s32.totalorder %s307, 15
      %s311 = scalar_select %p310, %s307, 15
      %p312 = scmp.lt.s32.totalorder %s23, 0
      %s313 = scalar_select %p312, %s23, 0
      %s314 = sadd.s32 %s313, %s311
      %s315 = smul.addr %s309, 16
      %s316 = sadd.s32 %s314, %s315
      %s317 = smul.addr %s316, 4
      %s318 = scalar_lea.vmem %s0, %s317
      %p319 = pneg %p61
      %p320 = pneg %p58
      %s321 = smul.u32 16, %s24
      %p322 = scmp.lt.s32.totalorder %s22, 1
      %s323 = scalar_select %p322, %s22, 1
      %p324 = scmp.lt.s32.totalorder %s321, 15
      %s325 = scalar_select %p324, %s321, 15
      %p326 = scmp.lt.s32.totalorder %s23, 0
      %s327 = scalar_select %p326, %s23, 0
      %s328 = sadd.s32 %s327, %s325
      %s329 = smul.addr %s323, 16
      %s330 = sadd.s32 %s328, %s329
      %s331 = smul.addr %s330, 4
      %s332 = scalar_lea.vmem %s1, %s331
      %p333 = pneg %p91
      %p334 = pneg %p88
      %p335 = scmp.lt.s32.totalorder %s23, 0
      %s336 = scalar_select %p335, %s23, 0
      %s337 = scalar_lea.vmem %s2, %s336
      %p338 = pneg %p117
      %p339 = pneg %p114
      %p340 = scmp.lt.s32.totalorder %s23, 0
      %s341 = scalar_select %p340, %s23, 0
      %s342 = scalar_lea.vmem %s3, %s341
      %p343 = pneg %p143
      %p344 = pneg %p140
      %p345 = scmp.lt.s32.totalorder %s23, 0
      %s346 = scalar_select %p345, %s23, 0
      %s347 = scalar_lea.vmem %s4, %s346
      %p348 = pneg %p169
      %p349 = pneg %p166
      %p350 = scmp.lt.s32.totalorder %s23, 0
      %s351 = scalar_select %p350, %s23, 0
      %s352 = scalar_lea.vmem %s5, %s351
      %p353 = pneg %p195
      %p354 = pneg %p192
      %p355 = pneg %p225
      %p356 = pneg %p222
      %s357 = smul.u32 16, %s23
      %p358 = scmp.lt.s32.totalorder %s22, 1
      %s359 = scalar_select %p358, %s22, 1
      %p360 = scmp.lt.s32.totalorder %s357, 15
      %s361 = scalar_select %p360, %s357, 15
      %p362 = scmp.lt.s32.totalorder %s24, 0
      %s363 = scalar_select %p362, %s24, 0
      %s364 = sadd.s32 %s363, %s361
      %s365 = smul.addr %s359, 16
      %s366 = sadd.s32 %s364, %s365
      %s367 = smul.addr %s366, 8
      %s368 = scalar_lea.vmem %s6, %s367
      %s369 = smul.u32 16, %s24
      %p370 = scmp.lt.s32.totalorder %s22, 1
      %s371 = scalar_select %p370, %s22, 1
      %p372 = scmp.lt.s32.totalorder %s369, 15
      %s373 = scalar_select %p372, %s369, 15
      %p374 = scmp.lt.s32.totalorder %s23, 0
      %s375 = scalar_select %p374, %s23, 0
      %s376 = sadd.s32 %s375, %s373
      %s377 = smul.addr %s371, 16
      %s378 = sadd.s32 %s376, %s377
      %s379 = smul.addr %s378, 4
      %s380 = scalar_lea.vmem %s0, %s379
      %s381 = smul.u32 16, %s24
      %s382 = smul.u32 16, %s24
      %p383 = scmp.lt.s32.totalorder %s22, 1
      %s384 = scalar_select %p383, %s22, 1
      %p385 = scmp.lt.s32.totalorder %s382, 15
      %s386 = scalar_select %p385, %s382, 15
      %p387 = scmp.lt.s32.totalorder %s23, 0
      %s388 = scalar_select %p387, %s23, 0
      %s389 = sadd.s32 %s388, %s386
      %s390 = smul.addr %s384, 16
      %s391 = sadd.s32 %s389, %s390
      %s392 = smul.addr %s391, 4
      %s393 = scalar_lea.vmem %s1, %s392
      %s394 = smul.u32 16, %s24
      %p395 = scmp.lt.s32.totalorder %s23, 0
      %s396 = scalar_select %p395, %s23, 0
      %s397 = scalar_lea.vmem %s2, %s396
      %p398 = scmp.lt.s32.totalorder %s23, 0
      %s399 = scalar_select %p398, %s23, 0
      %s400 = scalar_lea.vmem %s3, %s399
      %p401 = scmp.lt.s32.totalorder %s23, 0
      %s402 = scalar_select %p401, %s23, 0
      %s403 = scalar_lea.vmem %s4, %s402
      %p404 = scmp.lt.s32.totalorder %s23, 0
      %s405 = scalar_select %p404, %s23, 0
      %s406 = scalar_lea.vmem %s5, %s405
      %s407 = smul.u32 16, %s23
      %p408 = scmp.lt.s32.totalorder %s22, 1
      %s409 = scalar_select %p408, %s22, 1
      %p410 = scmp.lt.s32.totalorder %s407, 15
      %s411 = scalar_select %p410, %s407, 15
      %p412 = scmp.lt.s32.totalorder %s24, 0
      %s413 = scalar_select %p412, %s24, 0
      %s414 = sadd.s32 %s413, %s411
      %s415 = smul.addr %s409, 16
      %s416 = sadd.s32 %s414, %s415
      %s417 = smul.addr %s416, 8
      %s418 = scalar_lea.vmem %s6, %s417
      %s419 = smul.u32 16, %s23
      %v420 = vld [vmem:[%s380] sm:$0xf]
      %v421 = vld [vmem:[%s380 + $0x4] sm:$0xf]
      %v422 = vld [vmem:[%s380 + $0x8] sm:$0xf]
      %v423 = vld [vmem:[%s380 + $0xc] sm:$0xf]
      %v424 = vld [vmem:[%s380 + $0x10] sm:$0xf]
      %v425 = vld [vmem:[%s380 + $0x14] sm:$0xf]
      %v426 = vld [vmem:[%s380 + $0x18] sm:$0xf]
      %v427 = vld [vmem:[%s380 + $0x1c] sm:$0xf]
      %v428 = vld [vmem:[%s380 + $0x20] sm:$0xf]
      %v429 = vld [vmem:[%s380 + $0x24] sm:$0xf]
      %v430 = vld [vmem:[%s380 + $0x28] sm:$0xf]
      %v431 = vld [vmem:[%s380 + $0x2c] sm:$0xf]
      %v432 = vld [vmem:[%s380 + $0x30] sm:$0xf]
      %v433 = vld [vmem:[%s380 + $0x34] sm:$0xf]
      %v434 = vld [vmem:[%s380 + $0x38] sm:$0xf]
      %v435 = vld [vmem:[%s380 + $0x3c] sm:$0xf]
      %v436 = vunpack.c.l.bf16 %v420
      %v437 = vunpack.c.l.bf16 %v421
      %v438 = vunpack.c.l.bf16 %v422
      %v439 = vunpack.c.l.bf16 %v423
      %v440 = vunpack.c.l.bf16 %v424
      %v441 = vunpack.c.l.bf16 %v425
      %v442 = vunpack.c.l.bf16 %v426
      %v443 = vunpack.c.l.bf16 %v427
      %v444 = vunpack.c.l.bf16 %v428
      %v445 = vunpack.c.l.bf16 %v429
      %v446 = vunpack.c.l.bf16 %v430
      %v447 = vunpack.c.l.bf16 %v431
      %v448 = vunpack.c.l.bf16 %v432
      %v449 = vunpack.c.l.bf16 %v433
      %v450 = vunpack.c.l.bf16 %v434
      %v451 = vunpack.c.l.bf16 %v435
      %v452 = vld [vmem:[%s393] sm:$0xf]
      %v453 = vld [vmem:[%s393 + $0x4] sm:$0xf]
      %v454 = vld [vmem:[%s393 + $0x8] sm:$0xf]
      %v455 = vld [vmem:[%s393 + $0xc] sm:$0xf]
      %v456 = vld [vmem:[%s393 + $0x10] sm:$0xf]
      %v457 = vld [vmem:[%s393 + $0x14] sm:$0xf]
      %v458 = vld [vmem:[%s393 + $0x18] sm:$0xf]
      %v459 = vld [vmem:[%s393 + $0x1c] sm:$0xf]
      %v460 = vld [vmem:[%s393 + $0x20] sm:$0xf]
      %v461 = vld [vmem:[%s393 + $0x24] sm:$0xf]
      %v462 = vld [vmem:[%s393 + $0x28] sm:$0xf]
      %v463 = vld [vmem:[%s393 + $0x2c] sm:$0xf]
      %v464 = vld [vmem:[%s393 + $0x30] sm:$0xf]
      %v465 = vld [vmem:[%s393 + $0x34] sm:$0xf]
      %v466 = vld [vmem:[%s393 + $0x38] sm:$0xf]
      %v467 = vld [vmem:[%s393 + $0x3c] sm:$0xf]
      %v468 = vunpack.c.l.bf16 %v452
      %v469 = vunpack.c.l.bf16 %v453
      %v470 = vunpack.c.l.bf16 %v454
      %v471 = vunpack.c.l.bf16 %v455
      %v472 = vunpack.c.l.bf16 %v456
      %v473 = vunpack.c.l.bf16 %v457
      %v474 = vunpack.c.l.bf16 %v458
      %v475 = vunpack.c.l.bf16 %v459
      %v476 = vunpack.c.l.bf16 %v460
      %v477 = vunpack.c.l.bf16 %v461
      %v478 = vunpack.c.l.bf16 %v462
      %v479 = vunpack.c.l.bf16 %v463
      %v480 = vunpack.c.l.bf16 %v464
      %v481 = vunpack.c.l.bf16 %v465
      %v482 = vunpack.c.l.bf16 %v466
      %v483 = vunpack.c.l.bf16 %v467
      %v484 = vld [vmem:[%s397] sm:$0x1]
      %v486 = vlaneseq
      %v487 = vshrl.u32 %v486, 7
      %v488 = vsub.s32 0, %v487
      %v489 = vrot.slane %v484, %v488
      %v491 = vmul.f32 %v436, %v489
      %v492 = vmul.f32 %v437, %v489
      %v493 = vmul.f32 %v438, %v489
      %v494 = vmul.f32 %v439, %v489
      %v495 = vmul.f32 %v440, %v489
      %v496 = vmul.f32 %v441, %v489
      %v497 = vmul.f32 %v442, %v489
      %v498 = vmul.f32 %v443, %v489
      %v499 = vmul.f32 %v444, %v489
      %v500 = vmul.f32 %v445, %v489
      %v501 = vmul.f32 %v446, %v489
      %v502 = vmul.f32 %v447, %v489
      %v503 = vmul.f32 %v448, %v489
      %v504 = vmul.f32 %v449, %v489
      %v505 = vmul.f32 %v450, %v489
      %v506 = vmul.f32 %v451, %v489
      %v507 = vld [vmem:[%s400] sm:$0x1]
      %v509 = vlaneseq
      %v510 = vshrl.u32 %v509, 7
      %v511 = vsub.s32 0, %v510
      %v512 = vrot.slane %v507, %v511
      %v514 = vadd.f32 %v491, %v512
      %v515 = vadd.f32 %v492, %v512
      %v516 = vadd.f32 %v493, %v512
      %v517 = vadd.f32 %v494, %v512
      %v518 = vadd.f32 %v495, %v512
      %v519 = vadd.f32 %v496, %v512
      %v520 = vadd.f32 %v497, %v512
      %v521 = vadd.f32 %v498, %v512
      %v522 = vadd.f32 %v499, %v512
      %v523 = vadd.f32 %v500, %v512
      %v524 = vadd.f32 %v501, %v512
      %v525 = vadd.f32 %v502, %v512
      %v526 = vadd.f32 %v503, %v512
      %v527 = vadd.f32 %v504, %v512
      %v528 = vadd.f32 %v505, %v512
      %v529 = vadd.f32 %v506, %v512
      %v530 = vld [vmem:[%s403] sm:$0x1]
      %v532 = vlaneseq
      %v533 = vshrl.u32 %v532, 7
      %v534 = vsub.s32 0, %v533
      %v535 = vrot.slane %v530, %v534
      %v537 = vmul.f32 %v468, %v535
      %v538 = vmul.f32 %v469, %v535
      %v539 = vmul.f32 %v470, %v535
      %v540 = vmul.f32 %v471, %v535
      %v541 = vmul.f32 %v472, %v535
      %v542 = vmul.f32 %v473, %v535
      %v543 = vmul.f32 %v474, %v535
      %v544 = vmul.f32 %v475, %v535
      %v545 = vmul.f32 %v476, %v535
      %v546 = vmul.f32 %v477, %v535
      %v547 = vmul.f32 %v478, %v535
      %v548 = vmul.f32 %v479, %v535
      %v549 = vmul.f32 %v480, %v535
      %v550 = vmul.f32 %v481, %v535
      %v551 = vmul.f32 %v482, %v535
      %v552 = vmul.f32 %v483, %v535
      %v553 = vld [vmem:[%s406] sm:$0x1]
      %v555 = vlaneseq
      %v556 = vshrl.u32 %v555, 7
      %v557 = vsub.s32 0, %v556
      %v558 = vrot.slane %v553, %v557
      %v560 = vadd.f32 %v537, %v558
      %v561 = vadd.f32 %v538, %v558
      %v562 = vadd.f32 %v539, %v558
      %v563 = vadd.f32 %v540, %v558
      %v564 = vadd.f32 %v541, %v558
      %v565 = vadd.f32 %v542, %v558
      %v566 = vadd.f32 %v543, %v558
      %v567 = vadd.f32 %v544, %v558
      %v568 = vadd.f32 %v545, %v558
      %v569 = vadd.f32 %v546, %v558
      %v570 = vadd.f32 %v547, %v558
      %v571 = vadd.f32 %v548, %v558
      %v572 = vadd.f32 %v549, %v558
      %v573 = vadd.f32 %v550, %v558
      %v574 = vadd.f32 %v551, %v558
      %v575 = vadd.f32 %v552, %v558
      %v576 = vadd.f32 %v560, %v514
      %v577 = vadd.f32 %v561, %v515
      %v578 = vadd.f32 %v562, %v516
      %v579 = vadd.f32 %v563, %v517
      %v580 = vadd.f32 %v564, %v518
      %v581 = vadd.f32 %v565, %v519
      %v582 = vadd.f32 %v566, %v520
      %v583 = vadd.f32 %v567, %v521
      %v584 = vadd.f32 %v568, %v522
      %v585 = vadd.f32 %v569, %v523
      %v586 = vadd.f32 %v570, %v524
      %v587 = vadd.f32 %v571, %v525
      %v588 = vadd.f32 %v572, %v526
      %v589 = vadd.f32 %v573, %v527
      %v590 = vadd.f32 %v574, %v528
      %v591 = vadd.f32 %v575, %v529
      %592 = vxpose.xlu0.b32.start [1/16] %v576, 128
      %593 = vxpose.xlu0.b32.cont [2/16] %v577, 128
      %594 = vxpose.xlu0.b32.cont [3/16] %v578, 128
      %595 = vxpose.xlu0.b32.cont [4/16] %v579, 128
      %596 = vxpose.xlu0.b32.cont [5/16] %v580, 128
      %597 = vxpose.xlu0.b32.cont [6/16] %v581, 128
      %598 = vxpose.xlu0.b32.cont [7/16] %v582, 128
      %599 = vxpose.xlu0.b32.cont [8/16] %v583, 128
      %600 = vxpose.xlu0.b32.cont [9/16] %v584, 128
      %601 = vxpose.xlu0.b32.cont [10/16] %v585, 128
      %602 = vxpose.xlu0.b32.cont [11/16] %v586, 128
      %603 = vxpose.xlu0.b32.cont [12/16] %v587, 128
      %604 = vxpose.xlu0.b32.cont [13/16] %v588, 128
      %605 = vxpose.xlu0.b32.cont [14/16] %v589, 128
      %606 = vxpose.xlu0.b32.cont [15/16] %v590, 128
      %607 = vxpose.xlu0.b32.end [16/16] %v591, 128
      %v608 = vpop.trf.xlu0
      %v609 = vpop.trf.xlu0
      %v610 = vpop.trf.xlu0
      %v611 = vpop.trf.xlu0
      %v612 = vpop.trf.xlu0
      %v613 = vpop.trf.xlu0
      %v614 = vpop.trf.xlu0
      %v615 = vpop.trf.xlu0
      %v616 = vpop.trf.xlu0
      %v617 = vpop.trf.xlu0
      %v618 = vpop.trf.xlu0
      %v619 = vpop.trf.xlu0
      %v620 = vpop.trf.xlu0
      %v621 = vpop.trf.xlu0
      %v622 = vpop.trf.xlu0
      %v623 = vpop.trf.xlu0
      %624 = vst [vmem:[%s418] sm:$0xff] %v608
      %625 = vst [vmem:[%s418 + $0x8] sm:$0xff] %v609
      %626 = vst [vmem:[%s418 + $0x10] sm:$0xff] %v610
      %627 = vst [vmem:[%s418 + $0x18] sm:$0xff] %v611
      %628 = vst [vmem:[%s418 + $0x20] sm:$0xff] %v612
      %629 = vst [vmem:[%s418 + $0x28] sm:$0xff] %v613
      %630 = vst [vmem:[%s418 + $0x30] sm:$0xff] %v614
      %631 = vst [vmem:[%s418 + $0x38] sm:$0xff] %v615
      %632 = vst [vmem:[%s418 + $0x40] sm:$0xff] %v616
      %633 = vst [vmem:[%s418 + $0x48] sm:$0xff] %v617
      %634 = vst [vmem:[%s418 + $0x50] sm:$0xff] %v618
      %635 = vst [vmem:[%s418 + $0x58] sm:$0xff] %v619
      %636 = vst [vmem:[%s418 + $0x60] sm:$0xff] %v620
      %637 = vst [vmem:[%s418 + $0x68] sm:$0xff] %v621
      %638 = vst [vmem:[%s418 + $0x70] sm:$0xff] %v622
      %639 = vst [vmem:[%s418 + $0x78] sm:$0xff] %v623
      %s640 = smul.u32 16, %s23
      %p641 = scmp.lt.s32.totalorder %s22, 1
      %s642 = scalar_select %p641, %s22, 1
      %p643 = scmp.lt.s32.totalorder %s640, 15
      %s644 = scalar_select %p643, %s640, 15
      %p645 = scmp.lt.s32.totalorder %s24, 0
      %s646 = scalar_select %p645, %s24, 0
      %s647 = sadd.s32 %s646, %s644
      %s648 = smul.addr %s642, 16
      %s649 = sadd.s32 %s647, %s648
      %s650 = smul.addr %s649, 8
      %s651 = scalar_lea.vmem %s6, %s650
      // Predicated region
      $region45: #{conv_tower_forward.5} parent=43 // pred_check
        %p652 = pneg %p222
      $region46: #{conv_tower_forward.5} parent=43 // pred_check_branch
        %654 = sbr.rel (%p652) target = $region48
      $region47: #{conv_tower_forward.5} parent=43 // pred_region
        %s655 = smul.u32 16, %s23
      $region48: #{conv_tower_forward.5} parent=43 // pred_fallthru
        _
    $region44: #{conv_tower_forward.5} parent=5 // pred_fallthru
      _
    %p656 = scmp.le.s32.totalorder 2, %s12
    // Predicated region
    $region49: #{conv_tower_forward.5} parent=5 // pred_check
      %p657 = pneg %p656
    $region50: #{conv_tower_forward.5} parent=5 // pred_check_branch
      %659 = sbr.rel (%p657) target = $region52
    $region51: #{conv_tower_forward.5} parent=5 // pred_region
      %s660 = ssub.s32 %s12, 2
      // Predicated region
      $region53: #{conv_tower_forward.5} parent=51 // pred_check
        %p661 = pneg %p228
      $region54: #{conv_tower_forward.5} parent=51 // pred_check_branch
        %663 = sbr.rel (%p661) target = $region56
      $region55: #{conv_tower_forward.5} parent=51 // pred_region
        %s664 = smul.u32 16, %s26
        %p665 = scmp.lt.s32.totalorder %s25, 1
        %s666 = scalar_select %p665, %s25, 1
        %p667 = scmp.lt.s32.totalorder %s664, 15
        %s668 = scalar_select %p667, %s664, 15
        %p669 = scmp.lt.s32.totalorder %s27, 0
        %s670 = scalar_select %p669, %s27, 0
        %s671 = sadd.s32 %s670, %s668
        %s672 = smul.addr %s666, 16
        %s673 = sadd.s32 %s671, %s672
        %s674 = smul.addr %s673, 8
        %s675 = scalar_lea.vmem %s6, %s674
      $region56: #{conv_tower_forward.5} parent=51 // pred_fallthru
        _
    $region52: #{conv_tower_forward.5} parent=5 // pred_fallthru
      _
  $region6: #{conv_tower_forward.5} parent=0 // loop_footer
    %s16 = sadd.s32 1, %s12
  $region7: #{conv_tower_forward.5} parent=0 // loop_footer_branch
    %11 = sbr.rel target = $region3
  $region8: #{conv_tower_forward.5} parent=0 // loop_exit
    _

// kernel: conv_tower_forward.3
$region0: #{conv_tower_forward.3}
  #allocation0 [shape = 'u32[]', space=smem, size = 0x4, offset = 0x4, fixed_abs, tag = 'smem constant byte address 0x4 - core index']
  #allocation1 [shape = 'u32[144,128]{1,0:T(1,128)}', space=vmem, size = 0x12000, scoped, tag = 'internal scratch']
  %s0 = inlined_call_operand.vmem [shape: bf16[2,128,128], index: 0, kind: input, shape index: {}]
  %s1 = inlined_call_operand.vmem [shape: f32[1,128], index: 1, kind: input, shape index: {}]
  %s2 = inlined_call_operand.vmem [shape: f32[1,128], index: 2, kind: input, shape index: {}]
  %s3 = inlined_call_operand.vmem [shape: bf16[128,128], index: 3, kind: input, shape index: {}]
  %s4 = inlined_call_operand.vmem [shape: f32[1,128], index: 4, kind: input, shape index: {}]
  %s5 = inlined_call_operand.vmem [shape: bf16[2,128,128], index: 5, kind: output, shape index: {0}]
  %s6 = inlined_call_operand.vmem [shape: f32[2,1,8,128], index: 6, kind: output, shape index: {1}]
  %7 = xla_tuple %s5, %s6
  %s8 = sld [smem:[#allocation0]]
  $region61: #{conv_tower_forward.3} parent=0
    _
  %s10 = ssub.s32 1, %s8
  %s11 = scalar_select 0, %s10, %s8
  loop: start=0, step=1, limit=4
  $region2: #{conv_tower_forward.3} parent=0 // loop_pre_header
    _
  $region3: #{conv_tower_forward.3} parent=0 // loop_header
    %s13 = sphi 0, %s17
    %p14 = scmp.ge.s32.totalorder %s13, 4
    %s20 = sphi 0, %s32
    %s21 = sphi 0, %s28
    %s22 = sphi 0, %s20
    %s23 = sphi 0, %s21
    %s24 = sphi 0, %s22
    %s25 = sphi 0, %s23
    %s37 = sphi 0, %s39
    %s40 = sphi 0, %s37
    %s41 = sphi 0, %s40
    %s57 = sphi 0, %s41
    %s61 = sphi 0, %s61
    %s63 = sphi 0, %s61
    %s64 = sphi 0, %s63
    %s78 = sphi 0, %s64
    %s82 = sphi 0, %s82
    %s84 = sphi 0, %s82
    %s85 = sphi 0, %s84
    %s99 = sphi 0, %s85
    %s103 = sphi 0, %s103
    %s105 = sphi 0, %s103
    %s106 = sphi 0, %s105
    %s120 = sphi 0, %s106
    %s124 = sphi 0, %s124
    %s126 = sphi 0, %s124
    %s127 = sphi 0, %s126
    %s141 = sphi 0, %s127
    %s149 = sphi 0, %s151
    %s152 = sphi 0, %s149
    %s153 = sphi 0, %s152
    %s169 = sphi 0, %s153
    %s177 = sphi 0, %s179
    %s180 = sphi 0, %s177
    %s181 = sphi 0, %s180
    %s197 = sphi 0, %s181
  $region4: #{conv_tower_forward.3} parent=0 // loop_header_branch
    %16 = sbr.rel (%p14) target = $region8
  $region5: #{conv_tower_forward.3} parent=0 // loop_body
    %s18 = ssub.s32 %s13, 1
    %s19 = ssub.s32 %s13, 2
    %s26 = sadd.s32 1, %s21
    %p27 = scmp.ge.s32.totalorder %s26, 1
    %s28 = scalar_select %p27, 0, %s26
    %s29 = sadd.s32 1, %s20
    %s30 = scalar_select %p27, %s29, %s20
    %p31 = scmp.ge.s32.totalorder %s30, 2
    %s32 = scalar_select %p31, 0, %s30
    %s33 = ssub.s32 %s20, %s32
    %s34 = ssub.s32 %s21, %s28
    %s35 = sor.u32 %s33, %s34
    %p36 = scmp.eq.s32.totalorder %s35, 0
    %s38 = sadd.s32 %s37, 1
    %s39 = scalar_select %p36, %s37, %s38
    %p42 = pneg %p36
    %p43 = scmp.eq.s32.totalorder %s13, 1
    %p44 = por %p42, %p43
    %p45 = scmp.ne.s32.totalorder %s37, %s40
    %p46 = scmp.eq.s32.totalorder %s13, 0
    %p47 = por %p45, %p46
    %p48 = scmp.ne.s32.totalorder %s37, %s40
    %p49 = scmp.eq.s32.totalorder %s18, 1
    %p50 = por %p48, %p49
    %p51 = scmp.ne.s32.totalorder %s40, %s41
    %p52 = scmp.eq.s32.totalorder %s18, 0
    %p53 = por %p51, %p52
    %p54 = scmp.ne.s32.totalorder %s40, %s41
    %p55 = scmp.eq.s32.totalorder %s19, 1
    %p56 = por %p54, %p55
    %p58 = scmp.ne.s32.totalorder %s41, %s57
    %p59 = scmp.eq.s32.totalorder %s19, 0
    %p60 = por %p58, %p59
    %s62 = sadd.s32 %s61, 1
    %p65 = scmp.eq.s32.totalorder %s13, 1
    %p66 = scmp.ne.s32.totalorder %s61, %s63
    %p67 = scmp.eq.s32.totalorder %s13, 0
    %p68 = por %p66, %p67
    %p69 = scmp.ne.s32.totalorder %s61, %s63
    %p70 = scmp.eq.s32.totalorder %s18, 1
    %p71 = por %p69, %p70
    %p72 = scmp.ne.s32.totalorder %s63, %s64
    %p73 = scmp.eq.s32.totalorder %s18, 0
    %p74 = por %p72, %p73
    %p75 = scmp.ne.s32.totalorder %s63, %s64
    %p76 = scmp.eq.s32.totalorder %s19, 1
    %p77 = por %p75, %p76
    %p79 = scmp.ne.s32.totalorder %s64, %s78
    %p80 = scmp.eq.s32.totalorder %s19, 0
    %p81 = por %p79, %p80
    %s83 = sadd.s32 %s82, 1
    %p86 = scmp.eq.s32.totalorder %s13, 1
    %p87 = scmp.ne.s32.totalorder %s82, %s84
    %p88 = scmp.eq.s32.totalorder %s13, 0
    %p89 = por %p87, %p88
    %p90 = scmp.ne.s32.totalorder %s82, %s84
    %p91 = scmp.eq.s32.totalorder %s18, 1
    %p92 = por %p90, %p91
    %p93 = scmp.ne.s32.totalorder %s84, %s85
    %p94 = scmp.eq.s32.totalorder %s18, 0
    %p95 = por %p93, %p94
    %p96 = scmp.ne.s32.totalorder %s84, %s85
    %p97 = scmp.eq.s32.totalorder %s19, 1
    %p98 = por %p96, %p97
    %p100 = scmp.ne.s32.totalorder %s85, %s99
    %p101 = scmp.eq.s32.totalorder %s19, 0
    %p102 = por %p100, %p101
    %s104 = sadd.s32 %s103, 1
    %p107 = scmp.eq.s32.totalorder %s13, 1
    %p108 = scmp.ne.s32.totalorder %s103, %s105
    %p109 = scmp.eq.s32.totalorder %s13, 0
    %p110 = por %p108, %p109
    %p111 = scmp.ne.s32.totalorder %s103, %s105
    %p112 = scmp.eq.s32.totalorder %s18, 1
    %p113 = por %p111, %p112
    %p114 = scmp.ne.s32.totalorder %s105, %s106
    %p115 = scmp.eq.s32.totalorder %s18, 0
    %p116 = por %p114, %p115
    %p117 = scmp.ne.s32.totalorder %s105, %s106
    %p118 = scmp.eq.s32.totalorder %s19, 1
    %p119 = por %p117, %p118
    %p121 = scmp.ne.s32.totalorder %s106, %s120
    %p122 = scmp.eq.s32.totalorder %s19, 0
    %p123 = por %p121, %p122
    %s125 = sadd.s32 %s124, 1
    %p128 = scmp.eq.s32.totalorder %s13, 1
    %p129 = scmp.ne.s32.totalorder %s124, %s126
    %p130 = scmp.eq.s32.totalorder %s13, 0
    %p131 = por %p129, %p130
    %p132 = scmp.ne.s32.totalorder %s124, %s126
    %p133 = scmp.eq.s32.totalorder %s18, 1
    %p134 = por %p132, %p133
    %p135 = scmp.ne.s32.totalorder %s126, %s127
    %p136 = scmp.eq.s32.totalorder %s18, 0
    %p137 = por %p135, %p136
    %p138 = scmp.ne.s32.totalorder %s126, %s127
    %p139 = scmp.eq.s32.totalorder %s19, 1
    %p140 = por %p138, %p139
    %p142 = scmp.ne.s32.totalorder %s127, %s141
    %p143 = scmp.eq.s32.totalorder %s19, 0
    %p144 = por %p142, %p143
    %s145 = ssub.s32 %s20, %s32
    %s146 = ssub.s32 %s21, %s28
    %s147 = sor.u32 %s145, %s146
    %p148 = scmp.eq.s32.totalorder %s147, 0
    %s150 = sadd.s32 %s149, 1
    %s151 = scalar_select %p148, %s149, %s150
    %p154 = pneg %p148
    %p155 = scmp.eq.s32.totalorder %s13, 1
    %p156 = por %p154, %p155
    %p157 = scmp.ne.s32.totalorder %s149, %s152
    %p158 = scmp.eq.s32.totalorder %s13, 0
    %p159 = por %p157, %p158
    %p160 = scmp.ne.s32.totalorder %s149, %s152
    %p161 = scmp.eq.s32.totalorder %s18, 1
    %p162 = por %p160, %p161
    %p163 = scmp.ne.s32.totalorder %s152, %s153
    %p164 = scmp.eq.s32.totalorder %s18, 0
    %p165 = por %p163, %p164
    %p166 = scmp.ne.s32.totalorder %s152, %s153
    %p167 = scmp.eq.s32.totalorder %s19, 1
    %p168 = por %p166, %p167
    %p170 = scmp.ne.s32.totalorder %s153, %s169
    %p171 = scmp.eq.s32.totalorder %s19, 0
    %p172 = por %p170, %p171
    %s173 = ssub.s32 %s20, %s32
    %s174 = ssub.s32 %s21, %s28
    %s175 = sor.u32 %s173, %s174
    %p176 = scmp.eq.s32.totalorder %s175, 0
    %s178 = sadd.s32 %s177, 1
    %s179 = scalar_select %p176, %s177, %s178
    %p182 = pneg %p176
    %p183 = scmp.eq.s32.totalorder %s13, 1
    %p184 = por %p182, %p183
    %p185 = scmp.ne.s32.totalorder %s177, %s180
    %p186 = scmp.eq.s32.totalorder %s13, 0
    %p187 = por %p185, %p186
    %p188 = scmp.ne.s32.totalorder %s177, %s180
    %p189 = scmp.eq.s32.totalorder %s18, 1
    %p190 = por %p188, %p189
    %p191 = scmp.ne.s32.totalorder %s180, %s181
    %p192 = scmp.eq.s32.totalorder %s18, 0
    %p193 = por %p191, %p192
    %p194 = scmp.ne.s32.totalorder %s180, %s181
    %p195 = scmp.eq.s32.totalorder %s19, 1
    %p196 = por %p194, %p195
    %p198 = scmp.ne.s32.totalorder %s181, %s197
    %p199 = scmp.eq.s32.totalorder %s19, 0
    %p200 = por %p198, %p199
    %p201 = scmp.le.s32.totalorder 1, %s13
    %p202 = scmp.lt.s32.totalorder %s13, 3
    %p203 = pnand %p201, %p202
    %p204 = pneg %p203
    // Predicated region
    $region9: #{conv_tower_forward.3} parent=5 // pred_check
      _
    $region10: #{conv_tower_forward.3} parent=5 // pred_check_branch
      %206 = sbr.rel (%p203) target = $region12
    $region11: #{conv_tower_forward.3} parent=5 // pred_region
      %s207 = ssub.s32 %s13, 1
      // Predicated region
      $region13: #{conv_tower_forward.3} parent=11 // pred_check
        %p208 = pneg %p74
      $region14: #{conv_tower_forward.3} parent=11 // pred_check_branch
        %210 = sbr.rel (%p208) target = $region16
      $region15: #{conv_tower_forward.3} parent=11 // pred_region
        _
      $region16: #{conv_tower_forward.3} parent=11 // pred_fallthru
        _
      // Predicated region
      $region17: #{conv_tower_forward.3} parent=11 // pred_check
        %p211 = pneg %p95
      $region18: #{conv_tower_forward.3} parent=11 // pred_check_branch
        %213 = sbr.rel (%p211) target = $region20
      $region19: #{conv_tower_forward.3} parent=11 // pred_region
        _
      $region20: #{conv_tower_forward.3} parent=11 // pred_fallthru
        _
      // Predicated region
      $region21: #{conv_tower_forward.3} parent=11 // pred_check
        %p214 = pneg %p116
      $region22: #{conv_tower_forward.3} parent=11 // pred_check_branch
        %216 = sbr.rel (%p214) target = $region24
      $region23: #{conv_tower_forward.3} parent=11 // pred_region
        _
      $region24: #{conv_tower_forward.3} parent=11 // pred_fallthru
        _
      // Predicated region
      $region25: #{conv_tower_forward.3} parent=11 // pred_check
        %p217 = pneg %p137
      $region26: #{conv_tower_forward.3} parent=11 // pred_check_branch
        %219 = sbr.rel (%p217) target = $region28
      $region27: #{conv_tower_forward.3} parent=11 // pred_region
        _
      $region28: #{conv_tower_forward.3} parent=11 // pred_fallthru
        _
    $region12: #{conv_tower_forward.3} parent=5 // pred_fallthru
      _
    %p220 = scmp.lt.s32.totalorder %s13, 2
    // Predicated region
    $region29: #{conv_tower_forward.3} parent=5 // pred_check
      %p221 = pneg %p220
    $region30: #{conv_tower_forward.3} parent=5 // pred_check_branch
      %223 = sbr.rel (%p221) target = $region32
    $region31: #{conv_tower_forward.3} parent=5 // pred_region
      // Predicated region
      $region33: #{conv_tower_forward.3} parent=31 // pred_check
        %p224 = pneg %p47
      $region34: #{conv_tower_forward.3} parent=31 // pred_check_branch
        %226 = sbr.rel (%p224) target = $region36
      $region35: #{conv_tower_forward.3} parent=31 // pred_region
        %s227 = smul.u32 16, %s21
        %p228 = scmp.lt.s32.totalorder %s20, 1
        %s229 = scalar_select %p228, %s20, 1
        %p230 = scmp.lt.s32.totalorder %s227, 15
        %s231 = scalar_select %p230, %s227, 15
        %s232 = smul.addr %s229, 16
        %s233 = sadd.s32 %s231, %s232
        %s234 = smul.addr %s233, 4
        %s235 = scalar_lea.vmem %s0, %s234
        %s236 = smul.u32 16, %s21
      $region36: #{conv_tower_forward.3} parent=31 // pred_fallthru
        _
    $region32: #{conv_tower_forward.3} parent=5 // pred_fallthru
      _
    %p237 = scmp.le.s32.totalorder 1, %s13
    %p238 = scmp.lt.s32.totalorder %s13, 3
    %p239 = pnand %p237, %p238
    %p240 = pneg %p239
    // Predicated region
    $region37: #{conv_tower_forward.3} parent=5 // pred_check
      _
    $region38: #{conv_tower_forward.3} parent=5 // pred_check_branch
      %242 = sbr.rel (%p239) target = $region40
    $region39: #{conv_tower_forward.3} parent=5 // pred_region
      %s243 = ssub.s32 %s13, 1
      %s244 = smul.u32 16, %s23
      %p245 = scmp.lt.s32.totalorder %s22, 1
      %s246 = scalar_select %p245, %s22, 1
      %p247 = scmp.lt.s32.totalorder %s244, 15
      %s248 = scalar_select %p247, %s244, 15
      %s249 = smul.addr %s246, 16
      %s250 = sadd.s32 %s248, %s249
      %s251 = smul.addr %s250, 4
      %s252 = scalar_lea.vmem %s0, %s251
      %p253 = pneg %p53
      %p254 = pneg %p50
      %p255 = pneg %p74
      %p256 = pneg %p71
      %p257 = pneg %p95
      %p258 = pneg %p92
      %p259 = pneg %p116
      %p260 = pneg %p113
      %p261 = pneg %p137
      %p262 = pneg %p134
      %p263 = pneg %p165
      %p264 = pneg %p162
      %s265 = smul.u32 16, %s23
      %p266 = scmp.lt.s32.totalorder %s22, 1
      %s267 = scalar_select %p266, %s22, 1
      %p268 = scmp.lt.s32.totalorder %s265, 15
      %s269 = scalar_select %p268, %s265, 15
      %s270 = smul.addr %s267, 16
      %s271 = sadd.s32 %s269, %s270
      %s272 = smul.addr %s271, 4
      %s273 = scalar_lea.vmem %s5, %s272
      %p274 = pneg %p193
      %p275 = pneg %p190
      %p276 = scmp.lt.s32.totalorder %s22, 1
      %s277 = scalar_select %p276, %s22, 1
      %p278 = scmp.lt.s32.totalorder %s23, 0
      %s279 = scalar_select %p278, %s23, 0
      %s280 = sadd.s32 %s279, %s277
      %s281 = smul.addr %s280, 8
      %s282 = scalar_lea.vmem %s6, %s281
      %s283 = smul.u32 16, %s23
      %p284 = scmp.lt.s32.totalorder %s22, 1
      %s285 = scalar_select %p284, %s22, 1
      %p286 = scmp.lt.s32.totalorder %s283, 15
      %s287 = scalar_select %p286, %s283, 15
      %s288 = smul.addr %s285, 16
      %s289 = sadd.s32 %s287, %s288
      %s290 = smul.addr %s289, 4
      %s291 = scalar_lea.vmem %s0, %s290
      %s292 = smul.u32 16, %s23
      %s293 = smul.u32 16, %s23
      %p294 = scmp.lt.s32.totalorder %s22, 1
      %s295 = scalar_select %p294, %s22, 1
      %p296 = scmp.lt.s32.totalorder %s293, 15
      %s297 = scalar_select %p296, %s293, 15
      %s298 = smul.addr %s295, 16
      %s299 = sadd.s32 %s297, %s298
      %s300 = smul.addr %s299, 4
      %s301 = scalar_lea.vmem %s5, %s300
      %s302 = smul.u32 16, %s23
      %p303 = scmp.lt.s32.totalorder %s22, 1
      %s304 = scalar_select %p303, %s22, 1
      %p305 = scmp.lt.s32.totalorder %s23, 0
      %s306 = scalar_select %p305, %s23, 0
      %s307 = sadd.s32 %s306, %s304
      %s308 = smul.addr %s307, 8
      %s309 = scalar_lea.vmem %s6, %s308
      %v311 = vld [vmem:[%s291] sm:$0xf]
      %v312 = vld [vmem:[%s291 + $0x4] sm:$0xf]
      %v313 = vld [vmem:[%s291 + $0x8] sm:$0xf]
      %v314 = vld [vmem:[%s291 + $0xc] sm:$0xf]
      %v315 = vld [vmem:[%s291 + $0x10] sm:$0xf]
      %v316 = vld [vmem:[%s291 + $0x14] sm:$0xf]
      %v317 = vld [vmem:[%s291 + $0x18] sm:$0xf]
      %v318 = vld [vmem:[%s291 + $0x1c] sm:$0xf]
      %v319 = vld [vmem:[%s291 + $0x20] sm:$0xf]
      %v320 = vld [vmem:[%s291 + $0x24] sm:$0xf]
      %v321 = vld [vmem:[%s291 + $0x28] sm:$0xf]
      %v322 = vld [vmem:[%s291 + $0x2c] sm:$0xf]
      %v323 = vld [vmem:[%s291 + $0x30] sm:$0xf]
      %v324 = vld [vmem:[%s291 + $0x34] sm:$0xf]
      %v325 = vld [vmem:[%s291 + $0x38] sm:$0xf]
      %v326 = vld [vmem:[%s291 + $0x3c] sm:$0xf]
      %v327 = vunpack.c.l.bf16 %v311
      %v328 = vunpack.c.l.bf16 %v312
      %v329 = vunpack.c.l.bf16 %v313
      %v330 = vunpack.c.l.bf16 %v314
      %v331 = vunpack.c.l.bf16 %v315
      %v332 = vunpack.c.l.bf16 %v316
      %v333 = vunpack.c.l.bf16 %v317
      %v334 = vunpack.c.l.bf16 %v318
      %v335 = vunpack.c.l.bf16 %v319
      %v336 = vunpack.c.l.bf16 %v320
      %v337 = vunpack.c.l.bf16 %v321
      %v338 = vunpack.c.l.bf16 %v322
      %v339 = vunpack.c.l.bf16 %v323
      %v340 = vunpack.c.l.bf16 %v324
      %v341 = vunpack.c.l.bf16 %v325
      %v342 = vunpack.c.l.bf16 %v326
      %v343 = vld [vmem:[%s1] sm:$0x1]
      %v345 = vlaneseq
      %v346 = vshrl.u32 %v345, 7
      %v347 = vsub.s32 0, %v346
      %v348 = vrot.slane %v343, %v347
      %v350 = vmul.f32 %v327, %v348
      %v351 = vmul.f32 %v328, %v348
      %v352 = vmul.f32 %v329, %v348
      %v353 = vmul.f32 %v330, %v348
      %v354 = vmul.f32 %v331, %v348
      %v355 = vmul.f32 %v332, %v348
      %v356 = vmul.f32 %v333, %v348
      %v357 = vmul.f32 %v334, %v348
      %v358 = vmul.f32 %v335, %v348
      %v359 = vmul.f32 %v336, %v348
      %v360 = vmul.f32 %v337, %v348
      %v361 = vmul.f32 %v338, %v348
      %v362 = vmul.f32 %v339, %v348
      %v363 = vmul.f32 %v340, %v348
      %v364 = vmul.f32 %v341, %v348
      %v365 = vmul.f32 %v342, %v348
      %v366 = vld [vmem:[%s2] sm:$0x1]
      %v368 = vlaneseq
      %v369 = vshrl.u32 %v368, 7
      %v370 = vsub.s32 0, %v369
      %v371 = vrot.slane %v366, %v370
      %v373 = vadd.f32 %v350, %v371
      %v374 = vadd.f32 %v351, %v371
      %v375 = vadd.f32 %v352, %v371
      %v376 = vadd.f32 %v353, %v371
      %v377 = vadd.f32 %v354, %v371
      %v378 = vadd.f32 %v355, %v371
      %v379 = vadd.f32 %v356, %v371
      %v380 = vadd.f32 %v357, %v371
      %v381 = vadd.f32 %v358, %v371
      %v382 = vadd.f32 %v359, %v371
      %v383 = vadd.f32 %v360, %v371
      %v384 = vadd.f32 %v361, %v371
      %v385 = vadd.f32 %v362, %v371
      %v386 = vadd.f32 %v363, %v371
      %v387 = vadd.f32 %v364, %v371
      %v388 = vadd.f32 %v365, %v371
      %v389 = vmul.f32 %v373, 0.5
      %v390 = vmul.f32 %v374, 0.5
      %v391 = vmul.f32 %v375, 0.5
      %v392 = vmul.f32 %v376, 0.5
      %v393 = vmul.f32 %v377, 0.5
      %v394 = vmul.f32 %v378, 0.5
      %v395 = vmul.f32 %v379, 0.5
      %v396 = vmul.f32 %v380, 0.5
      %v397 = vmul.f32 %v381, 0.5
      %v398 = vmul.f32 %v382, 0.5
      %v399 = vmul.f32 %v383, 0.5
      %v400 = vmul.f32 %v384, 0.5
      %v401 = vmul.f32 %v385, 0.5
      %v402 = vmul.f32 %v386, 0.5
      %v403 = vmul.f32 %v387, 0.5
      %v404 = vmul.f32 %v388, 0.5
      %v405 = vmul.f32 %v373, 0.70710677
      %v406 = vmul.f32 %v374, 0.70710677
      %v407 = vmul.f32 %v375, 0.70710677
      %v408 = vmul.f32 %v376, 0.70710677
      %v409 = vmul.f32 %v377, 0.70710677
      %v410 = vmul.f32 %v378, 0.70710677
      %v411 = vmul.f32 %v379, 0.70710677
      %v412 = vmul.f32 %v380, 0.70710677
      %v413 = vmul.f32 %v381, 0.70710677
      %v414 = vmul.f32 %v382, 0.70710677
      %v415 = vmul.f32 %v383, 0.70710677
      %v416 = vmul.f32 %v384, 0.70710677
      %v417 = vmul.f32 %v385, 0.70710677
      %v418 = vmul.f32 %v386, 0.70710677
      %v419 = vmul.f32 %v387, 0.70710677
      %v420 = vmul.f32 %v388, 0.70710677
      %v421 = verf.f32.pop %v405
      %v422 = verf.f32.pop %v406
      %v423 = verf.f32.pop %v407
      %v424 = verf.f32.pop %v408
      %v425 = verf.f32.pop %v409
      %v426 = verf.f32.pop %v410
      %v427 = verf.f32.pop %v411
      %v428 = verf.f32.pop %v412
      %v429 = verf.f32.pop %v413
      %v430 = verf.f32.pop %v414
      %v431 = verf.f32.pop %v415
      %v432 = verf.f32.pop %v416
      %v433 = verf.f32.pop %v417
      %v434 = verf.f32.pop %v418
      %v435 = verf.f32.pop %v419
      %v436 = verf.f32.pop %v420
      %v437 = vadd.f32 %v421, 1.0
      %v438 = vadd.f32 %v422, 1.0
      %v439 = vadd.f32 %v423, 1.0
      %v440 = vadd.f32 %v424, 1.0
      %v441 = vadd.f32 %v425, 1.0
      %v442 = vadd.f32 %v426, 1.0
      %v443 = vadd.f32 %v427, 1.0
      %v444 = vadd.f32 %v428, 1.0
      %v445 = vadd.f32 %v429, 1.0
      %v446 = vadd.f32 %v430, 1.0
      %v447 = vadd.f32 %v431, 1.0
      %v448 = vadd.f32 %v432, 1.0
      %v449 = vadd.f32 %v433, 1.0
      %v450 = vadd.f32 %v434, 1.0
      %v451 = vadd.f32 %v435, 1.0
      %v452 = vadd.f32 %v436, 1.0
      %v453 = vmul.f32 %v389, %v437
      %v454 = vmul.f32 %v390, %v438
      %v455 = vmul.f32 %v391, %v439
      %v456 = vmul.f32 %v392, %v440
      %v457 = vmul.f32 %v393, %v441
      %v458 = vmul.f32 %v394, %v442
      %v459 = vmul.f32 %v395, %v443
      %v460 = vmul.f32 %v396, %v444
      %v461 = vmul.f32 %v397, %v445
      %v462 = vmul.f32 %v398, %v446
      %v463 = vmul.f32 %v399, %v447
      %v464 = vmul.f32 %v400, %v448
      %v465 = vmul.f32 %v401, %v449
      %v466 = vmul.f32 %v402, %v450
      %v467 = vmul.f32 %v403, %v451
      %v468 = vmul.f32 %v404, %v452
      %v469 = vpack.c.bf16 %v454, %v453
      %v470 = vpack.c.bf16 %v456, %v455
      %v471 = vpack.c.bf16 %v458, %v457
      %v472 = vpack.c.bf16 %v460, %v459
      %v473 = vpack.c.bf16 %v462, %v461
      %v474 = vpack.c.bf16 %v464, %v463
      %v475 = vpack.c.bf16 %v466, %v465
      %v476 = vpack.c.bf16 %v468, %v467
      %v477 = vld [vmem:[%s3] sm:$0xf]
      %v478 = vld [vmem:[%s3 + $0x4] sm:$0xf]
      %v479 = vld [vmem:[%s3 + $0x8] sm:$0xf]
      %v480 = vld [vmem:[%s3 + $0xc] sm:$0xf]
      %v481 = vld [vmem:[%s3 + $0x10] sm:$0xf]
      %v482 = vld [vmem:[%s3 + $0x14] sm:$0xf]
      %v483 = vld [vmem:[%s3 + $0x18] sm:$0xf]
      %v484 = vld [vmem:[%s3 + $0x1c] sm:$0xf]
      %v485 = vld [vmem:[%s3 + $0x20] sm:$0xf]
      %v486 = vld [vmem:[%s3 + $0x24] sm:$0xf]
      %v487 = vld [vmem:[%s3 + $0x28] sm:$0xf]
      %v488 = vld [vmem:[%s3 + $0x2c] sm:$0xf]
      %v489 = vld [vmem:[%s3 + $0x30] sm:$0xf]
      %v490 = vld [vmem:[%s3 + $0x34] sm:$0xf]
      %v491 = vld [vmem:[%s3 + $0x38] sm:$0xf]
      %v492 = vld [vmem:[%s3 + $0x3c] sm:$0xf]
      %v493 = vld [vmem:[%s4] sm:$0x1]
      %v495 = vlaneseq
      %v496 = vshrl.u32 %v495, 7
      %v497 = vsub.s32 0, %v496
      %v498 = vrot.slane %v493, %v497
      %v516 = vunpack.c.l.b16 %v477
      %v517 = vunpack.c.l.b16 %v478
      %v518 = vunpack.c.l.b16 %v479
      %v519 = vunpack.c.l.b16 %v480
      %v520 = vunpack.c.l.b16 %v481
      %v521 = vunpack.c.l.b16 %v482
      %v522 = vunpack.c.l.b16 %v483
      %v523 = vunpack.c.l.b16 %v484
      %v524 = vunpack.c.l.b16 %v485
      %v525 = vunpack.c.l.b16 %v486
      %v526 = vunpack.c.l.b16 %v487
      %v527 = vunpack.c.l.b16 %v488
      %v528 = vunpack.c.l.b16 %v489
      %v529 = vunpack.c.l.b16 %v490
      %v530 = vunpack.c.l.b16 %v491
      %v531 = vunpack.c.l.b16 %v492
      %v532 = vpack.c.b16 %v517, %v516
      %v533 = vpack.c.b16 %v519, %v518
      %v534 = vpack.c.b16 %v521, %v520
      %v535 = vpack.c.b16 %v523, %v522
      %v536 = vpack.c.b16 %v525, %v524
      %v537 = vpack.c.b16 %v527, %v526
      %v538 = vpack.c.b16 %v529, %v528
      %v539 = vpack.c.b16 %v531, %v530
      %548 = vmatprep.subr.bf16.mxu0 0
      %549 = vmatpush1.bf16.msra.mxu0 %v539
      %550 = vmatprep.subr.bf16.mxu0 0
      %551 = vmatpush1.bf16.msra.mxu0 %v538
      %552 = vmatprep.subr.bf16.mxu0 0
      %553 = vmatpush1.bf16.msra.mxu0 %v537
      %554 = vmatprep.subr.bf16.mxu0 0
      %555 = vmatpush1.bf16.msra.mxu0 %v536
      %556 = vmatprep.subr.bf16.mxu0 0
      %557 = vmatpush1.bf16.msra.mxu0 %v535
      %558 = vmatprep.subr.bf16.mxu0 0
      %559 = vmatpush1.bf16.msra.mxu0 %v534
      %560 = vmatprep.subr.bf16.mxu0 0
      %561 = vmatpush1.bf16.msra.mxu0 %v533
      %562 = vmatprep.subr.bf16.mxu0 0
      %563 = vmatpush1.bf16.msra.mxu0 %v532
      %564 = vmatprep.subr.bf16.mxu0 0
      %565 = vmatpush2.bf16.msra.mxu0 0
      %566 = vmatprep.subr.bf16.mxu0 0
      %567 = vmatpush2.bf16.msra.mxu0 0
      %568 = vmatprep.subr.bf16.mxu0 0
      %569 = vmatpush2.bf16.msra.mxu0 0
      %570 = vmatprep.subr.bf16.mxu0 0
      %571 = vmatpush2.bf16.msra.mxu0 0
      %572 = vmatprep.subr.bf16.mxu0 0
      %573 = vmatpush2.bf16.msra.mxu0 0
      %574 = vmatprep.subr.bf16.mxu0 0
      %575 = vmatpush2.bf16.msra.mxu0 0
      %576 = vmatprep.subr.bf16.mxu0 0
      %577 = vmatpush2.bf16.msra.mxu0 0
      %578 = vmatprep.subr.bf16.mxu0 0
      %579 = vmatpush2.bf16.msra.mxu0 0
      %580 = vmatprep.mubr.bf16.mxu0 0
      %581 = vmatmul.mubr.bf16.gmra.mxu0 %v469
      %v582 = vpop.f32.mrf.mxu0
      %v583 = vadd.f32 %v498, %v582
      %v584 = vpop.f32.mrf.mxu0
      %v585 = vpop.f32.mrf.mxu0
      %v586 = vadd.f32 %v498, %v585
      %v587 = vpop.f32.mrf.mxu0
      %588 = vmatprep.mubr.bf16.mxu0 0
      %589 = vmatmul.mubr.bf16.gmra.mxu0 %v470
      %v590 = vpop.f32.mrf.mxu0
      %v591 = vadd.f32 %v498, %v590
      %v592 = vpop.f32.mrf.mxu0
      %v593 = vpop.f32.mrf.mxu0
      %v594 = vadd.f32 %v498, %v593
      %v595 = vpop.f32.mrf.mxu0
      %596 = vmatprep.mubr.bf16.mxu0 0
      %597 = vmatmul.mubr.bf16.gmra.mxu0 %v471
      %v598 = vpop.f32.mrf.mxu0
      %v599 = vadd.f32 %v498, %v598
      %v600 = vpop.f32.mrf.mxu0
      %v601 = vpop.f32.mrf.mxu0
      %v602 = vadd.f32 %v498, %v601
      %v603 = vpop.f32.mrf.mxu0
      %604 = vmatprep.mubr.bf16.mxu0 0
      %605 = vmatmul.mubr.bf16.gmra.mxu0 %v472
      %v606 = vpop.f32.mrf.mxu0
      %v607 = vadd.f32 %v498, %v606
      %v608 = vpop.f32.mrf.mxu0
      %v609 = vpop.f32.mrf.mxu0
      %v610 = vadd.f32 %v498, %v609
      %v611 = vpop.f32.mrf.mxu0
      %612 = vmatprep.mubr.bf16.mxu0 0
      %613 = vmatmul.mubr.bf16.gmra.mxu0 %v473
      %v614 = vpop.f32.mrf.mxu0
      %v615 = vadd.f32 %v498, %v614
      %v616 = vpop.f32.mrf.mxu0
      %v617 = vpop.f32.mrf.mxu0
      %v618 = vadd.f32 %v498, %v617
      %v619 = vpop.f32.mrf.mxu0
      %620 = vmatprep.mubr.bf16.mxu0 0
      %621 = vmatmul.mubr.bf16.gmra.mxu0 %v474
      %v622 = vpop.f32.mrf.mxu0
      %v623 = vadd.f32 %v498, %v622
      %v624 = vpop.f32.mrf.mxu0
      %v625 = vpop.f32.mrf.mxu0
      %v626 = vadd.f32 %v498, %v625
      %v627 = vpop.f32.mrf.mxu0
      %628 = vmatprep.mubr.bf16.mxu0 0
      %629 = vmatmul.mubr.bf16.gmra.mxu0 %v475
      %v630 = vpop.f32.mrf.mxu0
      %v631 = vadd.f32 %v498, %v630
      %v632 = vpop.f32.mrf.mxu0
      %v633 = vpop.f32.mrf.mxu0
      %v634 = vadd.f32 %v498, %v633
      %v635 = vpop.f32.mrf.mxu0
      %636 = vmatprep.mubr.bf16.mxu0 0
      %637 = vmatmul.mubr.bf16.gmra.mxu0 %v476
      %v638 = vpop.f32.mrf.mxu0
      %v639 = vadd.f32 %v498, %v638
      %v640 = vpop.f32.mrf.mxu0
      %v641 = vpop.f32.mrf.mxu0
      %v642 = vadd.f32 %v498, %v641
      %v643 = vpop.f32.mrf.mxu0
      %644 = vdwg.mxu0
      %v645 = vpack.c.bf16 %v586, %v583
      %v646 = vpack.c.bf16 %v594, %v591
      %v647 = vpack.c.bf16 %v602, %v599
      %v648 = vpack.c.bf16 %v610, %v607
      %v649 = vpack.c.bf16 %v618, %v615
      %v650 = vpack.c.bf16 %v626, %v623
      %v651 = vpack.c.bf16 %v634, %v631
      %v652 = vpack.c.bf16 %v642, %v639
      %v661 = vunpack.c.l.b16 %v645
      %v662 = vunpack.c.h.b16 %v645
      %v663 = vunpack.c.l.b16 %v646
      %v664 = vunpack.c.h.b16 %v646
      %v665 = vunpack.c.l.b16 %v647
      %v666 = vunpack.c.h.b16 %v647
      %v667 = vunpack.c.l.b16 %v648
      %v668 = vunpack.c.h.b16 %v648
      %v669 = vunpack.c.l.b16 %v649
      %v670 = vunpack.c.h.b16 %v649
      %v671 = vunpack.c.l.b16 %v650
      %v672 = vunpack.c.h.b16 %v650
      %v673 = vunpack.c.l.b16 %v651
      %v674 = vunpack.c.h.b16 %v651
      %v675 = vunpack.c.l.b16 %v652
      %v676 = vunpack.c.h.b16 %v652
      %v677 = vpack.c.b16 %v661, %v661
      %v678 = vpack.c.b16 %v662, %v662
      %v679 = vpack.c.b16 %v663, %v663
      %v680 = vpack.c.b16 %v664, %v664
      %v681 = vpack.c.b16 %v665, %v665
      %v682 = vpack.c.b16 %v666, %v666
      %v683 = vpack.c.b16 %v667, %v667
      %v684 = vpack.c.b16 %v668, %v668
      %v685 = vpack.c.b16 %v669, %v669
      %v686 = vpack.c.b16 %v670, %v670
      %v687 = vpack.c.b16 %v671, %v671
      %v688 = vpack.c.b16 %v672, %v672
      %v689 = vpack.c.b16 %v673, %v673
      %v690 = vpack.c.b16 %v674, %v674
      %v691 = vpack.c.b16 %v675, %v675
      %v692 = vpack.c.b16 %v676, %v676
      %709 = vst [vmem:[%s301] sm:$0xf] %v677
      %710 = vst [vmem:[%s301 + $0x4] sm:$0xf] %v678
      %711 = vst [vmem:[%s301 + $0x8] sm:$0xf] %v679
      %712 = vst [vmem:[%s301 + $0xc] sm:$0xf] %v680
      %713 = vst [vmem:[%s301 + $0x10] sm:$0xf] %v681
      %714 = vst [vmem:[%s301 + $0x14] sm:$0xf] %v682
      %715 = vst [vmem:[%s301 + $0x18] sm:$0xf] %v683
      %716 = vst [vmem:[%s301 + $0x1c] sm:$0xf] %v684
      %717 = vst [vmem:[%s301 + $0x20] sm:$0xf] %v685
      %718 = vst [vmem:[%s301 + $0x24] sm:$0xf] %v686
      %719 = vst [vmem:[%s301 + $0x28] sm:$0xf] %v687
      %720 = vst [vmem:[%s301 + $0x2c] sm:$0xf] %v688
      %721 = vst [vmem:[%s301 + $0x30] sm:$0xf] %v689
      %722 = vst [vmem:[%s301 + $0x34] sm:$0xf] %v690
      %723 = vst [vmem:[%s301 + $0x38] sm:$0xf] %v691
      %724 = vst [vmem:[%s301 + $0x3c] sm:$0xf] %v692
      %v725 = vlaneseq
      %v726 = vshrl.u32 %v725, 7
      %v727 = vadd.s32 %v726, 8
      %v728 = vadd.s32 %v726, 16
      %v729 = vadd.s32 %v726, 24
      %v730 = vadd.s32 %v726, 32
      %v731 = vadd.s32 %v726, 40
      %v732 = vadd.s32 %v726, 48
      %v733 = vadd.s32 %v726, 56
      %v734 = vadd.s32 %v726, 64
      %v735 = vadd.s32 %v726, 72
      %v736 = vadd.s32 %v726, 80
      %v737 = vadd.s32 %v726, 88
      %v738 = vadd.s32 %v726, 96
      %v739 = vadd.s32 %v726, 104
      %v740 = vadd.s32 %v726, 112
      %v741 = vadd.s32 %v726, 120
      %s742 = smul.u32 %s23, 128
      %v743 = vstv %s742
      %v744 = vadd.s32 %v726, %v743
      %v745 = vadd.s32 %v727, %v743
      %v746 = vadd.s32 %v728, %v743
      %v747 = vadd.s32 %v729, %v743
      %v748 = vadd.s32 %v730, %v743
      %v749 = vadd.s32 %v731, %v743
      %v750 = vadd.s32 %v732, %v743
      %v751 = vadd.s32 %v733, %v743
      %v752 = vadd.s32 %v734, %v743
      %v753 = vadd.s32 %v735, %v743
      %v754 = vadd.s32 %v736, %v743
      %v755 = vadd.s32 %v737, %v743
      %v756 = vadd.s32 %v738, %v743
      %v757 = vadd.s32 %v739, %v743
      %v758 = vadd.s32 %v740, %v743
      %v759 = vadd.s32 %v741, %v743
      %vm760 = vcmp.lt.s32.totalorder %v744, 16
      %vm761 = vcmp.lt.s32.totalorder %v745, 16
      %vm762 = vcmp.lt.s32.totalorder %v746, 16
      %vm763 = vcmp.lt.s32.totalorder %v747, 16
      %vm764 = vcmp.lt.s32.totalorder %v748, 16
      %vm765 = vcmp.lt.s32.totalorder %v749, 16
      %vm766 = vcmp.lt.s32.totalorder %v750, 16
      %vm767 = vcmp.lt.s32.totalorder %v751, 16
      %vm768 = vcmp.lt.s32.totalorder %v752, 16
      %vm769 = vcmp.lt.s32.totalorder %v753, 16
      %vm770 = vcmp.lt.s32.totalorder %v754, 16
      %vm771 = vcmp.lt.s32.totalorder %v755, 16
      %vm772 = vcmp.lt.s32.totalorder %v756, 16
      %vm773 = vcmp.lt.s32.totalorder %v757, 16
      %vm774 = vcmp.lt.s32.totalorder %v758, 16
      %vm775 = vcmp.lt.s32.totalorder %v759, 16
      %v776 = vsel %vm760, 1, 0
      %v777 = vsel %vm761, 1, 0
      %v778 = vsel %vm762, 1, 0
      %v779 = vsel %vm763, 1, 0
      %v780 = vsel %vm764, 1, 0
      %v781 = vsel %vm765, 1, 0
      %v782 = vsel %vm766, 1, 0
      %v783 = vsel %vm767, 1, 0
      %v784 = vsel %vm768, 1, 0
      %v785 = vsel %vm769, 1, 0
      %v786 = vsel %vm770, 1, 0
      %v787 = vsel %vm771, 1, 0
      %v788 = vsel %vm772, 1, 0
      %v789 = vsel %vm773, 1, 0
      %v790 = vsel %vm774, 1, 0
      %v791 = vsel %vm775, 1, 0
      %vm792 = vcmp.eq.s32.totalorder %v776, 1
      %vm793 = vcmp.eq.s32.totalorder %v777, 1
      %vm794 = vcmp.eq.s32.totalorder %v778, 1
      %vm795 = vcmp.eq.s32.totalorder %v779, 1
      %vm796 = vcmp.eq.s32.totalorder %v780, 1
      %vm797 = vcmp.eq.s32.totalorder %v781, 1
      %vm798 = vcmp.eq.s32.totalorder %v782, 1
      %vm799 = vcmp.eq.s32.totalorder %v783, 1
      %vm800 = vcmp.eq.s32.totalorder %v784, 1
      %vm801 = vcmp.eq.s32.totalorder %v785, 1
      %vm802 = vcmp.eq.s32.totalorder %v786, 1
      %vm803 = vcmp.eq.s32.totalorder %v787, 1
      %vm804 = vcmp.eq.s32.totalorder %v788, 1
      %vm805 = vcmp.eq.s32.totalorder %v789, 1
      %vm806 = vcmp.eq.s32.totalorder %v790, 1
      %vm807 = vcmp.eq.s32.totalorder %v791, 1
      %v808 = vsel %vm792, %v583, 0.0
      %v809 = vsel %vm793, %v586, 0.0
      %v810 = vsel %vm794, %v591, 0.0
      %v811 = vsel %vm795, %v594, 0.0
      %v812 = vsel %vm796, %v599, 0.0
      %v813 = vsel %vm797, %v602, 0.0
      %v814 = vsel %vm798, %v607, 0.0
      %v815 = vsel %vm799, %v610, 0.0
      %v816 = vsel %vm800, %v615, 0.0
      %v817 = vsel %vm801, %v618, 0.0
      %v818 = vsel %vm802, %v623, 0.0
      %v819 = vsel %vm803, %v626, 0.0
      %v820 = vsel %vm804, %v631, 0.0
      %v821 = vsel %vm805, %v634, 0.0
      %v822 = vsel %vm806, %v639, 0.0
      %v823 = vsel %vm807, %v642, 0.0
      %v824 = vadd.f32 %v808, %v809
      %v825 = vadd.f32 %v824, %v810
      %v826 = vadd.f32 %v825, %v811
      %v827 = vadd.f32 %v826, %v812
      %v828 = vadd.f32 %v827, %v813
      %v829 = vadd.f32 %v828, %v814
      %v830 = vadd.f32 %v829, %v815
      %v831 = vadd.f32 %v830, %v816
      %v832 = vadd.f32 %v831, %v817
      %v833 = vadd.f32 %v832, %v818
      %v834 = vadd.f32 %v833, %v819
      %v835 = vadd.f32 %v834, %v820
      %v836 = vadd.f32 %v835, %v821
      %v837 = vadd.f32 %v836, %v822
      %v838 = vadd.f32 %v837, %v823
      %v839 = vrot.slane %v838, 4
      %v840 = vadd.f32 %v838, %v839
      %v841 = vrot.slane %v840, 2
      %v842 = vadd.f32 %v840, %v841
      %v843 = vrot.slane %v842, 1
      %v844 = vadd.f32 %v842, %v843
      %v845 = vmul.f32 %v808, %v808
      %v846 = vmul.f32 %v809, %v809
      %v847 = vmul.f32 %v810, %v810
      %v848 = vmul.f32 %v811, %v811
      %v849 = vmul.f32 %v812, %v812
      %v850 = vmul.f32 %v813, %v813
      %v851 = vmul.f32 %v814, %v814
      %v852 = vmul.f32 %v815, %v815
      %v853 = vmul.f32 %v816, %v816
      %v854 = vmul.f32 %v817, %v817
      %v855 = vmul.f32 %v818, %v818
      %v856 = vmul.f32 %v819, %v819
      %v857 = vmul.f32 %v820, %v820
      %v858 = vmul.f32 %v821, %v821
      %v859 = vmul.f32 %v822, %v822
      %v860 = vmul.f32 %v823, %v823
      %v861 = vadd.f32 %v845, %v846
      %v862 = vadd.f32 %v861, %v847
      %v863 = vadd.f32 %v862, %v848
      %v864 = vadd.f32 %v863, %v849
      %v865 = vadd.f32 %v864, %v850
      %v866 = vadd.f32 %v865, %v851
      %v867 = vadd.f32 %v866, %v852
      %v868 = vadd.f32 %v867, %v853
      %v869 = vadd.f32 %v868, %v854
      %v870 = vadd.f32 %v869, %v855
      %v871 = vadd.f32 %v870, %v856
      %v872 = vadd.f32 %v871, %v857
      %v873 = vadd.f32 %v872, %v858
      %v874 = vadd.f32 %v873, %v859
      %v875 = vadd.f32 %v874, %v860
      %v876 = vrot.slane %v875, 4
      %v877 = vadd.f32 %v875, %v876
      %v878 = vrot.slane %v877, 2
      %v879 = vadd.f32 %v877, %v878
      %v880 = vrot.slane %v879, 1
      %v881 = vadd.f32 %v879, %v880
      %vm882 = vcmp.eq.s32.totalorder %v726, 0
      %vm883 = vcmp.eq.s32.totalorder %v726, 1
      %v884 = vsel %vm883, %v881, 0.0
      %v885 = vsel %vm882, %v844, %v884
      %886 = vst [vmem:[%s309] sm:$0xff] %v885
      %s887 = smul.u32 16, %s23
      %p888 = scmp.lt.s32.totalorder %s22, 1
      %s889 = scalar_select %p888, %s22, 1
      %p890 = scmp.lt.s32.totalorder %s887, 15
      %s891 = scalar_select %p890, %s887, 15
      %s892 = smul.addr %s889, 16
      %s893 = sadd.s32 %s891, %s892
      %s894 = smul.addr %s893, 4
      %s895 = scalar_lea.vmem %s5, %s894
      %p896 = scmp.lt.s32.totalorder %s22, 1
      %s897 = scalar_select %p896, %s22, 1
      %p898 = scmp.lt.s32.totalorder %s23, 0
      %s899 = scalar_select %p898, %s23, 0
      %s900 = sadd.s32 %s899, %s897
      %s901 = smul.addr %s900, 8
      %s902 = scalar_lea.vmem %s6, %s901
      // Predicated region
      $region41: #{conv_tower_forward.3} parent=39 // pred_check
        %p903 = pneg %p162
      $region42: #{conv_tower_forward.3} parent=39 // pred_check_branch
        %905 = sbr.rel (%p903) target = $region44
      $region43: #{conv_tower_forward.3} parent=39 // pred_region
        %s906 = smul.u32 16, %s23
      $region44: #{conv_tower_forward.3} parent=39 // pred_fallthru
        _
      // Predicated region
      $region45: #{conv_tower_forward.3} parent=39 // pred_check
        %p907 = pneg %p190
      $region46: #{conv_tower_forward.3} parent=39 // pred_check_branch
        %909 = sbr.rel (%p907) target = $region48
      $region47: #{conv_tower_forward.3} parent=39 // pred_region
        _
      $region48: #{conv_tower_forward.3} parent=39 // pred_fallthru
        _
    $region40: #{conv_tower_forward.3} parent=5 // pred_fallthru
      _
    %p910 = scmp.le.s32.totalorder 2, %s13
    // Predicated region
    $region49: #{conv_tower_forward.3} parent=5 // pred_check
      %p911 = pneg %p910
    $region50: #{conv_tower_forward.3} parent=5 // pred_check_branch
      %913 = sbr.rel (%p911) target = $region52
    $region51: #{conv_tower_forward.3} parent=5 // pred_region
      %s914 = ssub.s32 %s13, 2
      // Predicated region
      $region53: #{conv_tower_forward.3} parent=51 // pred_check
        %p915 = pneg %p168
      $region54: #{conv_tower_forward.3} parent=51 // pred_check_branch
        %917 = sbr.rel (%p915) target = $region56
      $region55: #{conv_tower_forward.3} parent=51 // pred_region
        %s918 = smul.u32 16, %s25
        %p919 = scmp.lt.s32.totalorder %s24, 1
        %s920 = scalar_select %p919, %s24, 1
        %p921 = scmp.lt.s32.totalorder %s918, 15
        %s922 = scalar_select %p921, %s918, 15
        %s923 = smul.addr %s920, 16
        %s924 = sadd.s32 %s922, %s923
        %s925 = smul.addr %s924, 4
        %s926 = scalar_lea.vmem %s5, %s925
      $region56: #{conv_tower_forward.3} parent=51 // pred_fallthru
        _
      // Predicated region
      $region57: #{conv_tower_forward.3} parent=51 // pred_check
        %p927 = pneg %p196
      $region58: #{conv_tower_forward.3} parent=51 // pred_check_branch
        %929 = sbr.rel (%p927) target = $region60
      $region59: #{conv_tower_forward.3} parent=51 // pred_region
        %p930 = scmp.lt.s32.totalorder %s24, 1
        %s931 = scalar_select %p930, %s24, 1
        %p932 = scmp.lt.s32.totalorder %s25, 0
        %s933 = scalar_select %p932, %s25, 0
        %s934 = sadd.s32 %s933, %s931
        %s935 = smul.addr %s934, 8
        %s936 = scalar_lea.vmem %s6, %s935
      $region60: #{conv_tower_forward.3} parent=51 // pred_fallthru
        _
    $region52: #{conv_tower_forward.3} parent=5 // pred_fallthru
      _
  $region6: #{conv_tower_forward.3} parent=0 // loop_footer
    %s17 = sadd.s32 1, %s13
  $region7: #{conv_tower_forward.3} parent=0 // loop_footer_branch
    %12 = sbr.rel target = $region3
  $region8: #{conv_tower_forward.3} parent=0 // loop_exit
    _

</llo_original>
